<compile_context>
chip_gen: v6e
topology: v6e:2x2x1
jax: 0.10.0
libtpu: 0.0.40
codegen_flags: <defaults>
</compile_context>

<pallas_src>
import numpy as np
import jax
import jax.numpy as jnp
from jax.experimental import pallas as pl
from jax.experimental.pallas import tpu as pltpu

MAX_SHIFT = 6  # largest filter size is 7 -> time shifts 0..6


# ----------------------------------------------------------------------------
# In-kernel building blocks (traced inside the Pallas kernel body)
# ----------------------------------------------------------------------------
def _multiconv_layer(x, wcat, bcat, wred, bred, xu_ref):
    """One fused MultiConvLayer (all compartments at once).

    x:    (B, T, Cin)   channels compartment-major
    wcat: (7*Cmax, M)   packed so rows [d*Cmax + c] carry the weight for time shift d
    bcat: (1, M)
    wred: (M, Cout)     block-diagonal 1x1 "dim_red" conv weight
    bred: (1, Cout)
    xu_ref: VMEM scratch (B, T, 7*Cmax), zeroed once at kernel start.
    """
    B, T, Cin = x.shape
    Cmax = xu_ref.shape[-1] // (MAX_SHIFT + 1)
    # Lay out the 7 causally-shifted views at static lane offsets of the unfold
    # scratch.  Rows [0, d) of each shift block are never written -> stay zero from
    # the one-time init, which realizes the causal left pad with no concat copies.
    for d in range(MAX_SHIFT + 1):
        if d == 0:
            xu_ref[:, :, 0:Cin] = x
        else:
            xu_ref[:, d:, d * Cmax:d * Cmax + Cin] = x[:, :T - d, :]
    xu = xu_ref[...].reshape(B * T, (MAX_SHIFT + 1) * Cmax)
    acc = jnp.dot(xu, wcat, preferred_element_type=jnp.float32) + bcat
    acc = jnp.maximum(acc, 0.0)
    red = jnp.dot(acc, wred, preferred_element_type=jnp.float32) + bred
    red = jnp.maximum(red, 0.0)
    return red.reshape(B, T, -1)


def _lstm_last(x, wih_t, whh_t, bias):
    """Fused (all compartments) batch_first LSTM; returns h at the last step.

    Gate columns are packed (i, f, o, g) with compartment-major blocks inside each
    gate group; `bias` already contains bih + bhh.
    x: (B, T, Hin); wih_t: (Hin, 4*HH); whh_t: (HH, 4*HH); bias: (1, 4*HH)
    """
    B, T, Hin = x.shape
    HH = whh_t.shape[0]
    # Hoisted input projection (single matmul, off the serial recurrence path),
    # with both biases pre-folded.
    xp = (jnp.dot(x.reshape(B * T, Hin), wih_t, preferred_element_type=jnp.float32)
          + bias).reshape(B, T, 4 * HH)
    h = jnp.zeros((B, HH), jnp.float32)
    c = jnp.zeros((B, HH), jnp.float32)
    for t in range(T):  # static unroll; T is small (8)
        gates = xp[:, t, :] + jnp.dot(h, whh_t, preferred_element_type=jnp.float32)
        sg = jax.nn.sigmoid(gates[:, :3 * HH])   # (i, f, o) in one EUP launch
        g = jnp.tanh(gates[:, 3 * HH:])          # g in one EUP launch
        i_g = sg[:, :HH]
        f_g = sg[:, HH:2 * HH]
        o_g = sg[:, 2 * HH:3 * HH]
        c = f_g * c + i_g * g
        h = o_g * jnp.tanh(c)
    return h


def _summary_kernel(
    x_ref,
    w0, b0, r0, rb0,
    w1, b1, r1, rb1,
    w2, b2, r2, rb2,
    wih, whh, blstm,
    out_ref,
    xu_ref,
):
    """Full SummaryNet (3 block-diagonal MultiConvLayers + fused LSTM last hidden)
    in a single grid step."""
    # Zero the unfold scratch once: the never-written rows/lanes act as the causal
    # pad and as zero inputs for the (zero-weight) unused lanes of the first layer.
    xu_ref[...] = jnp.zeros(xu_ref.shape, xu_ref.dtype)
    h = x_ref[...]
    h = _multiconv_layer(h, w0[...], b0[...], r0[...], rb0[...], xu_ref)
    h = _multiconv_layer(h, w1[...], b1[...], r1[...], rb1[...], xu_ref)
    h = _multiconv_layer(h, w2[...], b2[...], r2[...], rb2[...], xu_ref)
    out_ref[...] = _lstm_last(h, wih[...], whh[...], blstm[...])


# ----------------------------------------------------------------------------
# Wrapper (plain JAX glue)
# ----------------------------------------------------------------------------
def summary_net_forward(x, packed_params, n_summary):
    """SummaryNet forward: one pallas_call, one grid step, output is (B, n_summary)
    directly (compartment-major, matching torch.cat on dim=-1)."""
    B, T, _ = x.shape
    Cmax = packed_params[0].shape[0] // (MAX_SHIFT + 1)
    return pl.pallas_call(
        _summary_kernel,
        out_shape=jax.ShapeDtypeStruct((B, n_summary), jnp.float32),
        scratch_shapes=[pltpu.VMEM((B, T, (MAX_SHIFT + 1) * Cmax), jnp.float32)],
    )(x, *packed_params)


# ----------------------------------------------------------------------------
# Parameter setup: PyTorch-shaped raw params + block-diagonally fused packed params
# ----------------------------------------------------------------------------
def init_params(key, in_channels, n_summary, num_compartments):
    nc = num_compartments
    in_c = in_channels // nc          # per-compartment input channels
    out_c = n_summary // nc           # per-compartment MultiConvNet width (= LSTM H)
    ch = out_c // 2
    H = out_c
    HH = nc * H
    Cmax = nc * max(in_c, out_c)      # widest fused channel count across layers

    raw_all = []
    for _comp in range(nc):
        raw = {"layers": [], "lstm": None}
        cin = in_c
        for _layer in range(3):
            conv_ws, conv_bs = [], []
            for f in range(2, 8):
                key, k1, k2 = jax.random.split(key, 3)
                conv_ws.append(jax.random.normal(k1, (ch, cin, f), jnp.float32) * 0.1)
                conv_bs.append(jax.random.normal(k2, (ch,), jnp.float32) * 0.1)
            key, k1, k2 = jax.random.split(key, 3)
            red_w = jax.random.normal(k1, (out_c, 6 * ch, 1), jnp.float32) * 0.1
            red_b = jax.random.normal(k2, (out_c,), jnp.float32) * 0.1
            raw["layers"].append((conv_ws, conv_bs, red_w, red_b))
            cin = out_c
        key, k1, k2, k3, k4 = jax.random.split(key, 5)
        wih = jax.random.normal(k1, (4 * H, H), jnp.float32) * 0.1
        whh = jax.random.normal(k2, (4 * H, H), jnp.float32) * 0.1
        bih = jax.random.normal(k3, (4 * H,), jnp.float32) * 0.1
        bhh = jax.random.normal(k4, (4 * H,), jnp.float32) * 0.1
        raw["lstm"] = (wih, whh, bih, bhh)
        raw_all.append(raw)

    # ---- fuse all compartments block-diagonally (one grid step, wider matmuls) ----
    packed = []
    for layer in range(3):
        cin = in_c if layer == 0 else out_c
        wcat = np.zeros(((MAX_SHIFT + 1) * Cmax, nc * 6 * ch), np.float32)
        bcat = np.zeros((1, nc * 6 * ch), np.float32)
        wred = np.zeros((nc * 6 * ch, nc * out_c), np.float32)
        bred = np.zeros((1, nc * out_c), np.float32)
        for i in range(nc):
            conv_ws, conv_bs, red_w, red_b = raw_all[i]["layers"][layer]
            for j, f in enumerate(range(2, 8)):
                w = np.asarray(conv_ws[j])  # (ch, cin, f)
                col0 = i * 6 * ch + j * ch
                # out[:, t] += x[:, t-d] @ w[:, :, f-1-d].T   for d = 0..f-1
                for d in range(f):
                    row0 = d * Cmax + i * cin
                    wcat[row0:row0 + cin, col0:col0 + ch] = w[:, :, f - 1 - d].T
                bcat[0, col0:col0 + ch] = np.asarray(conv_bs[j])
            wred[i * 6 * ch:(i + 1) * 6 * ch, i * out_c:(i + 1) * out_c] = (
                np.asarray(red_w)[:, :, 0].T)
            bred[0, i * out_c:(i + 1) * out_c] = np.asarray(red_b)
        packed += [jnp.asarray(wcat), jnp.asarray(bcat),
                   jnp.asarray(wred), jnp.asarray(bred)]

    # LSTM: gate columns reordered from PyTorch (i, f, g, o) to (i, f, o, g) so the
    # kernel does ONE sigmoid over [:, :3*HH] and ONE tanh over [:, 3*HH:], with
    # bih + bhh folded into a single bias (added once in the hoisted projection).
    gate_perm = (0, 1, 3, 2)
    wih_full = np.zeros((nc * H, 4 * HH), np.float32)
    whh_full = np.zeros((nc * H, 4 * HH), np.float32)
    bias_full = np.zeros((1, 4 * HH), np.float32)
    for i in range(nc):
        wih, whh, bih, bhh = (np.asarray(a) for a in raw_all[i]["lstm"])
        for gt, pt in enumerate(gate_perm):
            cols = slice(gt * HH + i * H, gt * HH + (i + 1) * H)
            wih_full[i * H:(i + 1) * H, cols] = wih[pt * H:(pt + 1) * H, :].T
            whh_full[i * H:(i + 1) * H, cols] = whh[pt * H:(pt + 1) * H, :].T
            bias_full[0, cols] = bih[pt * H:(pt + 1) * H] + bhh[pt * H:(pt + 1) * H]
    packed += [jnp.asarray(wih_full), jnp.asarray(whh_full), jnp.asarray(bias_full)]

    return packed, raw_all


# ----------------------------------------------------------------------------
# Independent NumPy reference (mirrors the PyTorch forward exactly)
# ----------------------------------------------------------------------------
def _np_causal_conv(x, w, b):
    B, T, C = x.shape
    O, _, f = w.shape
    xpad = np.concatenate([np.zeros((B, f - 1, C), x.dtype), x], axis=1)
    out = np.zeros((B, T, O), dtype=np.float64)
    for t in range(T):
        win = xpad[:, t:t + f, :]  # (B, f, C)
        out[:, t, :] = np.einsum("bkc,ock->bo", win, w) + b
    return out.astype(np.float32)


def _np_multiconv_layer(x, conv_ws, conv_bs, red_w, red_b):
    feats = [_np_causal_conv(x, np.asarray(w), np.asarray(b))
             for w, b in zip(conv_ws, conv_bs)]
    out = np.maximum(np.concatenate(feats, axis=-1), 0.0)
    out = out @ np.asarray(red_w)[:, :, 0].T + np.asarray(red_b)
    return np.maximum(out, 0.0)


def _np_lstm_last(x, wih, whh, bih, bhh):
    B, T, _ = x.shape
    H = whh.shape[1]
    h = np.zeros((B, H))
    c = np.zeros((B, H))
    sig = lambda z: 1.0 / (1.0 + np.exp(-z))
    for t in range(T):
        gates = x[:, t, :] @ wih.T + bih + h @ whh.T + bhh
        i = sig(gates[:, :H])
        f = sig(gates[:, H:2 * H])
        g = np.tanh(gates[:, 2 * H:3 * H])
        o = sig(gates[:, 3 * H:])
        c = f * c + i * g
        h = o * np.tanh(c)
    return h.astype(np.float32)


def reference_forward(x, raw_params, num_compartments):
    comp_size = x.shape[-1] // num_compartments
    outs = []
    for i in range(num_compartments):
        h = x[..., i * comp_size:(i + 1) * comp_size]
        rp = raw_params[i]
        for conv_ws, conv_bs, red_w, red_b in rp["layers"]:
            h = _np_multiconv_layer(h, conv_ws, conv_bs, red_w, red_b)
        wih, whh, bih, bhh = (np.asarray(a) for a in rp["lstm"])
        outs.append(_np_lstm_last(h, wih, whh, bih, bhh))
    return np.concatenate(outs, axis=-1)


# ----------------------------------------------------------------------------
if __name__ == "__main__":
    B, T = 2, 8
    in_channels, n_summary, num_compartments = 4, 32, 2

    key = jax.random.PRNGKey(0)
    key, kx = jax.random.split(key)
    x = jax.random.normal(kx, (B, T, in_channels), jnp.float32)

    packed_params, raw_params = init_params(key, in_channels, n_summary,
                                            num_compartments)

    out = summary_net_forward(x, packed_params, n_summary)
    out = jax.block_until_ready(out)

    ref = reference_forward(np.asarray(x), raw_params, num_compartments)

    assert out.shape == (B, n_summary), out.shape
    err = np.max(np.abs(np.asarray(out) - ref))
    assert np.allclose(np.asarray(out), ref, atol=2e-3, rtol=2e-3), f"max abs err {err}"
    print("KERNEL_OK")
</pallas_src>

<mosaic_0001>
module attributes {stable_mosaic.version = 11 : i64} {
  func.func @_summary_kernel(%arg0: memref<2x8x4xf32, #tpu.memory_space<vmem>>, %arg1: memref<224x96xf32, #tpu.memory_space<vmem>>, %arg2: memref<1x96xf32, #tpu.memory_space<vmem>>, %arg3: memref<96x32xf32, #tpu.memory_space<vmem>>, %arg4: memref<1x32xf32, #tpu.memory_space<vmem>>, %arg5: memref<224x96xf32, #tpu.memory_space<vmem>>, %arg6: memref<1x96xf32, #tpu.memory_space<vmem>>, %arg7: memref<96x32xf32, #tpu.memory_space<vmem>>, %arg8: memref<1x32xf32, #tpu.memory_space<vmem>>, %arg9: memref<224x96xf32, #tpu.memory_space<vmem>>, %arg10: memref<1x96xf32, #tpu.memory_space<vmem>>, %arg11: memref<96x32xf32, #tpu.memory_space<vmem>>, %arg12: memref<1x32xf32, #tpu.memory_space<vmem>>, %arg13: memref<32x128xf32, #tpu.memory_space<vmem>>, %arg14: memref<32x128xf32, #tpu.memory_space<vmem>>, %arg15: memref<1x128xf32, #tpu.memory_space<vmem>>, %arg16: memref<2x32xf32, #tpu.memory_space<vmem>>, %arg17: memref<2x8x224xf32, #tpu.memory_space<vmem>>) attributes {dimension_semantics = [], scalar_prefetch = 0 : i64, scratch_operands = 1 : i64, tpu.core_type = #tpu.core_type<tc>} {
    %cst = arith.constant 0.000000e+00 : f32
    %0 = vector.broadcast %cst : f32 to vector<2x8x224xf32>
    %c0 = arith.constant 0 : index
    %c0_0 = arith.constant 0 : index
    %c0_1 = arith.constant 0 : index
    %1 = vector.load %arg17[%c0, %c0_0, %c0_1] : memref<2x8x224xf32, #tpu.memory_space<vmem>>, vector<2x8x224xf32>
    tpu.vector_store %arg17[%c0, %c0_0, %c0_1], %0 {strides = array<i32>} : memref<2x8x224xf32, #tpu.memory_space<vmem>>, vector<2x8x224xf32>,
    %c0_2 = arith.constant 0 : index
    %c0_3 = arith.constant 0 : index
    %c0_4 = arith.constant 0 : index
    %2 = vector.load %arg0[%c0_2, %c0_3, %c0_4] : memref<2x8x4xf32, #tpu.memory_space<vmem>>, vector<2x8x4xf32>
    %c0_5 = arith.constant 0 : index
    %c0_6 = arith.constant 0 : index
    %3 = vector.load %arg1[%c0_5, %c0_6] : memref<224x96xf32, #tpu.memory_space<vmem>>, vector<224x96xf32>
    %c0_7 = arith.constant 0 : index
    %c0_8 = arith.constant 0 : index
    %4 = vector.load %arg2[%c0_7, %c0_8] : memref<1x96xf32, #tpu.memory_space<vmem>>, vector<1x96xf32>
    %c0_9 = arith.constant 0 : index
    %c0_10 = arith.constant 0 : index
    %5 = vector.load %arg3[%c0_9, %c0_10] : memref<96x32xf32, #tpu.memory_space<vmem>>, vector<96x32xf32>
    %c0_11 = arith.constant 0 : index
    %c0_12 = arith.constant 0 : index
    %6 = vector.load %arg4[%c0_11, %c0_12] : memref<1x32xf32, #tpu.memory_space<vmem>>, vector<1x32xf32>
    %c0_13 = arith.constant 0 : index
    %c0_14 = arith.constant 0 : index
    %c0_15 = arith.constant 0 : index
    %7 = vector.load %arg17[%c0_13, %c0_14, %c0_15] : memref<2x8x224xf32, #tpu.memory_space<vmem>>, vector<2x8x4xf32>
    tpu.vector_store %arg17[%c0_13, %c0_14, %c0_15], %2 {strides = array<i32>} : memref<2x8x224xf32, #tpu.memory_space<vmem>>, vector<2x8x4xf32>,
    %8 = vector.extract_strided_slice %2 {offsets = [0, 0, 0], sizes = [2, 7, 4], strides = [1, 1, 1]} : vector<2x8x4xf32> to vector<2x7x4xf32>
    %c0_16 = arith.constant 0 : index
    %c1 = arith.constant 1 : index
    %c32 = arith.constant 32 : index
    %9 = vector.load %arg17[%c0_16, %c1, %c32] : memref<2x8x224xf32, #tpu.memory_space<vmem>>, vector<2x7x4xf32>
    tpu.vector_store %arg17[%c0_16, %c1, %c32], %8 {strides = array<i32>} : memref<2x8x224xf32, #tpu.memory_space<vmem>>, vector<2x7x4xf32>,
    %10 = vector.extract_strided_slice %2 {offsets = [0, 0, 0], sizes = [2, 6, 4], strides = [1, 1, 1]} : vector<2x8x4xf32> to vector<2x6x4xf32>
    %c0_17 = arith.constant 0 : index
    %c2 = arith.constant 2 : index
    %c64 = arith.constant 64 : index
    %11 = vector.load %arg17[%c0_17, %c2, %c64] : memref<2x8x224xf32, #tpu.memory_space<vmem>>, vector<2x6x4xf32>
    tpu.vector_store %arg17[%c0_17, %c2, %c64], %10 {strides = array<i32>} : memref<2x8x224xf32, #tpu.memory_space<vmem>>, vector<2x6x4xf32>,
    %12 = vector.extract_strided_slice %2 {offsets = [0, 0, 0], sizes = [2, 5, 4], strides = [1, 1, 1]} : vector<2x8x4xf32> to vector<2x5x4xf32>
    %c0_18 = arith.constant 0 : index
    %c3 = arith.constant 3 : index
    %c96 = arith.constant 96 : index
    %13 = vector.load %arg17[%c0_18, %c3, %c96] : memref<2x8x224xf32, #tpu.memory_space<vmem>>, vector<2x5x4xf32>
    tpu.vector_store %arg17[%c0_18, %c3, %c96], %12 {strides = array<i32>} : memref<2x8x224xf32, #tpu.memory_space<vmem>>, vector<2x5x4xf32>,
    %14 = vector.extract_strided_slice %2 {offsets = [0, 0, 0], sizes = [2, 4, 4], strides = [1, 1, 1]} : vector<2x8x4xf32> to vector<2x4x4xf32>
    %c0_19 = arith.constant 0 : index
    %c4 = arith.constant 4 : index
    %c128 = arith.constant 128 : index
    %15 = vector.load %arg17[%c0_19, %c4, %c128] : memref<2x8x224xf32, #tpu.memory_space<vmem>>, vector<2x4x4xf32>
    tpu.vector_store %arg17[%c0_19, %c4, %c128], %14 {strides = array<i32>} : memref<2x8x224xf32, #tpu.memory_space<vmem>>, vector<2x4x4xf32>,
    %16 = vector.extract_strided_slice %2 {offsets = [0, 0, 0], sizes = [2, 3, 4], strides = [1, 1, 1]} : vector<2x8x4xf32> to vector<2x3x4xf32>
    %c0_20 = arith.constant 0 : index
    %c5 = arith.constant 5 : index
    %c160 = arith.constant 160 : index
    %17 = vector.load %arg17[%c0_20, %c5, %c160] : memref<2x8x224xf32, #tpu.memory_space<vmem>>, vector<2x3x4xf32>
    tpu.vector_store %arg17[%c0_20, %c5, %c160], %16 {strides = array<i32>} : memref<2x8x224xf32, #tpu.memory_space<vmem>>, vector<2x3x4xf32>,
    %18 = vector.extract_strided_slice %2 {offsets = [0, 0, 0], sizes = [2, 2, 4], strides = [1, 1, 1]} : vector<2x8x4xf32> to vector<2x2x4xf32>
    %c0_21 = arith.constant 0 : index
    %c6 = arith.constant 6 : index
    %c192 = arith.constant 192 : index
    %19 = vector.load %arg17[%c0_21, %c6, %c192] : memref<2x8x224xf32, #tpu.memory_space<vmem>>, vector<2x2x4xf32>
    tpu.vector_store %arg17[%c0_21, %c6, %c192], %18 {strides = array<i32>} : memref<2x8x224xf32, #tpu.memory_space<vmem>>, vector<2x2x4xf32>,
    %c0_22 = arith.constant 0 : index
    %c0_23 = arith.constant 0 : index
    %c0_24 = arith.constant 0 : index
    %20 = vector.load %arg17[%c0_22, %c0_23, %c0_24] : memref<2x8x224xf32, #tpu.memory_space<vmem>>, vector<2x8x224xf32>
    %21 = vector.shape_cast %20 : vector<2x8x224xf32> to vector<16x224xf32>
    %cst_25 = arith.constant dense<0.000000e+00> : vector<16x96xf32>
    %22 = tpu.matmul %21, %3, %cst_25 {dimension_numbers = #tpu.dot_dimension_numbers<[1], [0], [0], [1], [0, 0, 1, 1], [], []>} : vector<16x224xf32>, vector<224x96xf32>, vector<16x96xf32> -> vector<16x96xf32>
    %23 = vector.broadcast %4 : vector<1x96xf32> to vector<16x96xf32>
    %24 = arith.addf %22, %23 : vector<16x96xf32>
    %cst_26 = arith.constant 0.000000e+00 : f32
    %25 = vector.broadcast %cst_26 : f32 to vector<16x96xf32>
    %26 = arith.maximumf %24, %25 : vector<16x96xf32>
    %cst_27 = arith.constant dense<0.000000e+00> : vector<16x32xf32>
    %27 = tpu.matmul %26, %5, %cst_27 {dimension_numbers = #tpu.dot_dimension_numbers<[1], [0], [0], [1], [0, 0, 1, 1], [], []>} : vector<16x96xf32>, vector<96x32xf32>, vector<16x32xf32> -> vector<16x32xf32>
    %28 = vector.broadcast %6 : vector<1x32xf32> to vector<16x32xf32>
    %29 = arith.addf %27, %28 : vector<16x32xf32>
    %cst_28 = arith.constant 0.000000e+00 : f32
    %30 = vector.broadcast %cst_28 : f32 to vector<16x32xf32>
    %31 = arith.maximumf %29, %30 : vector<16x32xf32>
    %32 = vector.shape_cast %31 : vector<16x32xf32> to vector<2x8x32xf32>
    %c0_29 = arith.constant 0 : index
    %c0_30 = arith.constant 0 : index
    %33 = vector.load %arg5[%c0_29, %c0_30] : memref<224x96xf32, #tpu.memory_space<vmem>>, vector<224x96xf32>
    %c0_31 = arith.constant 0 : index
    %c0_32 = arith.constant 0 : index
    %34 = vector.load %arg6[%c0_31, %c0_32] : memref<1x96xf32, #tpu.memory_space<vmem>>, vector<1x96xf32>
    %c0_33 = arith.constant 0 : index
    %c0_34 = arith.constant 0 : index
    %35 = vector.load %arg7[%c0_33, %c0_34] : memref<96x32xf32, #tpu.memory_space<vmem>>, vector<96x32xf32>
    %c0_35 = arith.constant 0 : index
    %c0_36 = arith.constant 0 : index
    %36 = vector.load %arg8[%c0_35, %c0_36] : memref<1x32xf32, #tpu.memory_space<vmem>>, vector<1x32xf32>
    %c0_37 = arith.constant 0 : index
    %c0_38 = arith.constant 0 : index
    %c0_39 = arith.constant 0 : index
    %37 = vector.load %arg17[%c0_37, %c0_38, %c0_39] : memref<2x8x224xf32, #tpu.memory_space<vmem>>, vector<2x8x32xf32>
    tpu.vector_store %arg17[%c0_37, %c0_38, %c0_39], %32 {strides = array<i32>} : memref<2x8x224xf32, #tpu.memory_space<vmem>>, vector<2x8x32xf32>,
    %38 = vector.extract_strided_slice %32 {offsets = [0, 0, 0], sizes = [2, 7, 32], strides = [1, 1, 1]} : vector<2x8x32xf32> to vector<2x7x32xf32>
    %c0_40 = arith.constant 0 : index
    %c1_41 = arith.constant 1 : index
    %c32_42 = arith.constant 32 : index
    %39 = vector.load %arg17[%c0_40, %c1_41, %c32_42] : memref<2x8x224xf32, #tpu.memory_space<vmem>>, vector<2x7x32xf32>
    tpu.vector_store %arg17[%c0_40, %c1_41, %c32_42], %38 {strides = array<i32>} : memref<2x8x224xf32, #tpu.memory_space<vmem>>, vector<2x7x32xf32>,
    %40 = vector.extract_strided_slice %32 {offsets = [0, 0, 0], sizes = [2, 6, 32], strides = [1, 1, 1]} : vector<2x8x32xf32> to vector<2x6x32xf32>
    %c0_43 = arith.constant 0 : index
    %c2_44 = arith.constant 2 : index
    %c64_45 = arith.constant 64 : index
    %41 = vector.load %arg17[%c0_43, %c2_44, %c64_45] : memref<2x8x224xf32, #tpu.memory_space<vmem>>, vector<2x6x32xf32>
    tpu.vector_store %arg17[%c0_43, %c2_44, %c64_45], %40 {strides = array<i32>} : memref<2x8x224xf32, #tpu.memory_space<vmem>>, vector<2x6x32xf32>,
    %42 = vector.extract_strided_slice %32 {offsets = [0, 0, 0], sizes = [2, 5, 32], strides = [1, 1, 1]} : vector<2x8x32xf32> to vector<2x5x32xf32>
    %c0_46 = arith.constant 0 : index
    %c3_47 = arith.constant 3 : index
    %c96_48 = arith.constant 96 : index
    %43 = vector.load %arg17[%c0_46, %c3_47, %c96_48] : memref<2x8x224xf32, #tpu.memory_space<vmem>>, vector<2x5x32xf32>
    tpu.vector_store %arg17[%c0_46, %c3_47, %c96_48], %42 {strides = array<i32>} : memref<2x8x224xf32, #tpu.memory_space<vmem>>, vector<2x5x32xf32>,
    %44 = vector.extract_strided_slice %32 {offsets = [0, 0, 0], sizes = [2, 4, 32], strides = [1, 1, 1]} : vector<2x8x32xf32> to vector<2x4x32xf32>
    %c0_49 = arith.constant 0 : index
    %c4_50 = arith.constant 4 : index
    %c128_51 = arith.constant 128 : index
    %45 = vector.load %arg17[%c0_49, %c4_50, %c128_51] : memref<2x8x224xf32, #tpu.memory_space<vmem>>, vector<2x4x32xf32>
    tpu.vector_store %arg17[%c0_49, %c4_50, %c128_51], %44 {strides = array<i32>} : memref<2x8x224xf32, #tpu.memory_space<vmem>>, vector<2x4x32xf32>,
    %46 = vector.extract_strided_slice %32 {offsets = [0, 0, 0], sizes = [2, 3, 32], strides = [1, 1, 1]} : vector<2x8x32xf32> to vector<2x3x32xf32>
    %c0_52 = arith.constant 0 : index
    %c5_53 = arith.constant 5 : index
    %c160_54 = arith.constant 160 : index
    %47 = vector.load %arg17[%c0_52, %c5_53, %c160_54] : memref<2x8x224xf32, #tpu.memory_space<vmem>>, vector<2x3x32xf32>
    tpu.vector_store %arg17[%c0_52, %c5_53, %c160_54], %46 {strides = array<i32>} : memref<2x8x224xf32, #tpu.memory_space<vmem>>, vector<2x3x32xf32>,
    %48 = vector.extract_strided_slice %32 {offsets = [0, 0, 0], sizes = [2, 2, 32], strides = [1, 1, 1]} : vector<2x8x32xf32> to vector<2x2x32xf32>
    %c0_55 = arith.constant 0 : index
    %c6_56 = arith.constant 6 : index
    %c192_57 = arith.constant 192 : index
    %49 = vector.load %arg17[%c0_55, %c6_56, %c192_57] : memref<2x8x224xf32, #tpu.memory_space<vmem>>, vector<2x2x32xf32>
    tpu.vector_store %arg17[%c0_55, %c6_56, %c192_57], %48 {strides = array<i32>} : memref<2x8x224xf32, #tpu.memory_space<vmem>>, vector<2x2x32xf32>,
    %c0_58 = arith.constant 0 : index
    %c0_59 = arith.constant 0 : index
    %c0_60 = arith.constant 0 : index
    %50 = vector.load %arg17[%c0_58, %c0_59, %c0_60] : memref<2x8x224xf32, #tpu.memory_space<vmem>>, vector<2x8x224xf32>
    %51 = vector.shape_cast %50 : vector<2x8x224xf32> to vector<16x224xf32>
    %cst_61 = arith.constant dense<0.000000e+00> : vector<16x96xf32>
    %52 = tpu.matmul %51, %33, %cst_61 {dimension_numbers = #tpu.dot_dimension_numbers<[1], [0], [0], [1], [0, 0, 1, 1], [], []>} : vector<16x224xf32>, vector<224x96xf32>, vector<16x96xf32> -> vector<16x96xf32>
    %53 = vector.broadcast %34 : vector<1x96xf32> to vector<16x96xf32>
    %54 = arith.addf %52, %53 : vector<16x96xf32>
    %cst_62 = arith.constant 0.000000e+00 : f32
    %55 = vector.broadcast %cst_62 : f32 to vector<16x96xf32>
    %56 = arith.maximumf %54, %55 : vector<16x96xf32>
    %cst_63 = arith.constant dense<0.000000e+00> : vector<16x32xf32>
    %57 = tpu.matmul %56, %35, %cst_63 {dimension_numbers = #tpu.dot_dimension_numbers<[1], [0], [0], [1], [0, 0, 1, 1], [], []>} : vector<16x96xf32>, vector<96x32xf32>, vector<16x32xf32> -> vector<16x32xf32>
    %58 = vector.broadcast %36 : vector<1x32xf32> to vector<16x32xf32>
    %59 = arith.addf %57, %58 : vector<16x32xf32>
    %cst_64 = arith.constant 0.000000e+00 : f32
    %60 = vector.broadcast %cst_64 : f32 to vector<16x32xf32>
    %61 = arith.maximumf %59, %60 : vector<16x32xf32>
    %62 = vector.shape_cast %61 : vector<16x32xf32> to vector<2x8x32xf32>
    %c0_65 = arith.constant 0 : index
    %c0_66 = arith.constant 0 : index
    %63 = vector.load %arg9[%c0_65, %c0_66] : memref<224x96xf32, #tpu.memory_space<vmem>>, vector<224x96xf32>
    %c0_67 = arith.constant 0 : index
    %c0_68 = arith.constant 0 : index
    %64 = vector.load %arg10[%c0_67, %c0_68] : memref<1x96xf32, #tpu.memory_space<vmem>>, vector<1x96xf32>
    %c0_69 = arith.constant 0 : index
    %c0_70 = arith.constant 0 : index
    %65 = vector.load %arg11[%c0_69, %c0_70] : memref<96x32xf32, #tpu.memory_space<vmem>>, vector<96x32xf32>
    %c0_71 = arith.constant 0 : index
    %c0_72 = arith.constant 0 : index
    %66 = vector.load %arg12[%c0_71, %c0_72] : memref<1x32xf32, #tpu.memory_space<vmem>>, vector<1x32xf32>
    %c0_73 = arith.constant 0 : index
    %c0_74 = arith.constant 0 : index
    %c0_75 = arith.constant 0 : index
    %67 = vector.load %arg17[%c0_73, %c0_74, %c0_75] : memref<2x8x224xf32, #tpu.memory_space<vmem>>, vector<2x8x32xf32>
    tpu.vector_store %arg17[%c0_73, %c0_74, %c0_75], %62 {strides = array<i32>} : memref<2x8x224xf32, #tpu.memory_space<vmem>>, vector<2x8x32xf32>,
    %68 = vector.extract_strided_slice %62 {offsets = [0, 0, 0], sizes = [2, 7, 32], strides = [1, 1, 1]} : vector<2x8x32xf32> to vector<2x7x32xf32>
    %c0_76 = arith.constant 0 : index
    %c1_77 = arith.constant 1 : index
    %c32_78 = arith.constant 32 : index
    %69 = vector.load %arg17[%c0_76, %c1_77, %c32_78] : memref<2x8x224xf32, #tpu.memory_space<vmem>>, vector<2x7x32xf32>
    tpu.vector_store %arg17[%c0_76, %c1_77, %c32_78], %68 {strides = array<i32>} : memref<2x8x224xf32, #tpu.memory_space<vmem>>, vector<2x7x32xf32>,
    %70 = vector.extract_strided_slice %62 {offsets = [0, 0, 0], sizes = [2, 6, 32], strides = [1, 1, 1]} : vector<2x8x32xf32> to vector<2x6x32xf32>
    %c0_79 = arith.constant 0 : index
    %c2_80 = arith.constant 2 : index
    %c64_81 = arith.constant 64 : index
    %71 = vector.load %arg17[%c0_79, %c2_80, %c64_81] : memref<2x8x224xf32, #tpu.memory_space<vmem>>, vector<2x6x32xf32>
    tpu.vector_store %arg17[%c0_79, %c2_80, %c64_81], %70 {strides = array<i32>} : memref<2x8x224xf32, #tpu.memory_space<vmem>>, vector<2x6x32xf32>,
    %72 = vector.extract_strided_slice %62 {offsets = [0, 0, 0], sizes = [2, 5, 32], strides = [1, 1, 1]} : vector<2x8x32xf32> to vector<2x5x32xf32>
    %c0_82 = arith.constant 0 : index
    %c3_83 = arith.constant 3 : index
    %c96_84 = arith.constant 96 : index
    %73 = vector.load %arg17[%c0_82, %c3_83, %c96_84] : memref<2x8x224xf32, #tpu.memory_space<vmem>>, vector<2x5x32xf32>
    tpu.vector_store %arg17[%c0_82, %c3_83, %c96_84], %72 {strides = array<i32>} : memref<2x8x224xf32, #tpu.memory_space<vmem>>, vector<2x5x32xf32>,
    %74 = vector.extract_strided_slice %62 {offsets = [0, 0, 0], sizes = [2, 4, 32], strides = [1, 1, 1]} : vector<2x8x32xf32> to vector<2x4x32xf32>
    %c0_85 = arith.constant 0 : index
    %c4_86 = arith.constant 4 : index
    %c128_87 = arith.constant 128 : index
    %75 = vector.load %arg17[%c0_85, %c4_86, %c128_87] : memref<2x8x224xf32, #tpu.memory_space<vmem>>, vector<2x4x32xf32>
    tpu.vector_store %arg17[%c0_85, %c4_86, %c128_87], %74 {strides = array<i32>} : memref<2x8x224xf32, #tpu.memory_space<vmem>>, vector<2x4x32xf32>,
    %76 = vector.extract_strided_slice %62 {offsets = [0, 0, 0], sizes = [2, 3, 32], strides = [1, 1, 1]} : vector<2x8x32xf32> to vector<2x3x32xf32>
    %c0_88 = arith.constant 0 : index
    %c5_89 = arith.constant 5 : index
    %c160_90 = arith.constant 160 : index
    %77 = vector.load %arg17[%c0_88, %c5_89, %c160_90] : memref<2x8x224xf32, #tpu.memory_space<vmem>>, vector<2x3x32xf32>
    tpu.vector_store %arg17[%c0_88, %c5_89, %c160_90], %76 {strides = array<i32>} : memref<2x8x224xf32, #tpu.memory_space<vmem>>, vector<2x3x32xf32>,
    %78 = vector.extract_strided_slice %62 {offsets = [0, 0, 0], sizes = [2, 2, 32], strides = [1, 1, 1]} : vector<2x8x32xf32> to vector<2x2x32xf32>
    %c0_91 = arith.constant 0 : index
    %c6_92 = arith.constant 6 : index
    %c192_93 = arith.constant 192 : index
    %79 = vector.load %arg17[%c0_91, %c6_92, %c192_93] : memref<2x8x224xf32, #tpu.memory_space<vmem>>, vector<2x2x32xf32>
    tpu.vector_store %arg17[%c0_91, %c6_92, %c192_93], %78 {strides = array<i32>} : memref<2x8x224xf32, #tpu.memory_space<vmem>>, vector<2x2x32xf32>,
    %c0_94 = arith.constant 0 : index
    %c0_95 = arith.constant 0 : index
    %c0_96 = arith.constant 0 : index
    %80 = vector.load %arg17[%c0_94, %c0_95, %c0_96] : memref<2x8x224xf32, #tpu.memory_space<vmem>>, vector<2x8x224xf32>
    %81 = vector.shape_cast %80 : vector<2x8x224xf32> to vector<16x224xf32>
    %cst_97 = arith.constant dense<0.000000e+00> : vector<16x96xf32>
    %82 = tpu.matmul %81, %63, %cst_97 {dimension_numbers = #tpu.dot_dimension_numbers<[1], [0], [0], [1], [0, 0, 1, 1], [], []>} : vector<16x224xf32>, vector<224x96xf32>, vector<16x96xf32> -> vector<16x96xf32>
    %83 = vector.broadcast %64 : vector<1x96xf32> to vector<16x96xf32>
    %84 = arith.addf %82, %83 : vector<16x96xf32>
    %cst_98 = arith.constant 0.000000e+00 : f32
    %85 = vector.broadcast %cst_98 : f32 to vector<16x96xf32>
    %86 = arith.maximumf %84, %85 : vector<16x96xf32>
    %cst_99 = arith.constant dense<0.000000e+00> : vector<16x32xf32>
    %87 = tpu.matmul %86, %65, %cst_99 {dimension_numbers = #tpu.dot_dimension_numbers<[1], [0], [0], [1], [0, 0, 1, 1], [], []>} : vector<16x96xf32>, vector<96x32xf32>, vector<16x32xf32> -> vector<16x32xf32>
    %88 = vector.broadcast %66 : vector<1x32xf32> to vector<16x32xf32>
    %89 = arith.addf %87, %88 : vector<16x32xf32>
    %cst_100 = arith.constant 0.000000e+00 : f32
    %90 = vector.broadcast %cst_100 : f32 to vector<16x32xf32>
    %91 = arith.maximumf %89, %90 : vector<16x32xf32>
    %92 = vector.shape_cast %91 : vector<16x32xf32> to vector<2x8x32xf32>
    %c0_101 = arith.constant 0 : index
    %c0_102 = arith.constant 0 : index
    %93 = vector.load %arg13[%c0_101, %c0_102] : memref<32x128xf32, #tpu.memory_space<vmem>>, vector<32x128xf32>
    %c0_103 = arith.constant 0 : index
    %c0_104 = arith.constant 0 : index
    %94 = vector.load %arg14[%c0_103, %c0_104] : memref<32x128xf32, #tpu.memory_space<vmem>>, vector<32x128xf32>
    %c0_105 = arith.constant 0 : index
    %c0_106 = arith.constant 0 : index
    %95 = vector.load %arg15[%c0_105, %c0_106] : memref<1x128xf32, #tpu.memory_space<vmem>>, vector<1x128xf32>
    %96 = vector.shape_cast %92 : vector<2x8x32xf32> to vector<16x32xf32>
    %cst_107 = arith.constant dense<0.000000e+00> : vector<16x128xf32>
    %97 = tpu.matmul %96, %93, %cst_107 {dimension_numbers = #tpu.dot_dimension_numbers<[1], [0], [0], [1], [0, 0, 1, 1], [], []>} : vector<16x32xf32>, vector<32x128xf32>, vector<16x128xf32> -> vector<16x128xf32>
    %98 = vector.broadcast %95 : vector<1x128xf32> to vector<16x128xf32>
    %99 = arith.addf %97, %98 : vector<16x128xf32>
    %100 = vector.shape_cast %99 : vector<16x128xf32> to vector<2x8x128xf32>
    %cst_108 = arith.constant 0.000000e+00 : f32
    %101 = vector.broadcast %cst_108 : f32 to vector<2x32xf32>
    %cst_109 = arith.constant 0.000000e+00 : f32
    %102 = vector.broadcast %cst_109 : f32 to vector<2x32xf32>
    %103 = vector.extract_strided_slice %100 {offsets = [0, 0, 0], sizes = [2, 1, 128], strides = [1, 1, 1]} : vector<2x8x128xf32> to vector<2x1x128xf32>
    %104 = vector.shape_cast %103 : vector<2x1x128xf32> to vector<2x128xf32>
    %cst_110 = arith.constant dense<0.000000e+00> : vector<2x128xf32>
    %105 = tpu.matmul %101, %94, %cst_110 {dimension_numbers = #tpu.dot_dimension_numbers<[1], [0], [0], [1], [0, 0, 1, 1], [], []>} : vector<2x32xf32>, vector<32x128xf32>, vector<2x128xf32> -> vector<2x128xf32>
    %106 = arith.addf %104, %105 : vector<2x128xf32>
    %107 = vector.extract_strided_slice %106 {offsets = [0, 0], sizes = [2, 96], strides = [1, 1]} : vector<2x128xf32> to vector<2x96xf32>
    %108 = arith.negf %107 : vector<2x96xf32>
    %109 = math.exp %108 : vector<2x96xf32>
    %cst_111 = arith.constant 1.000000e+00 : f32
    %110 = vector.broadcast %cst_111 : f32 to vector<2x96xf32>
    %111 = arith.addf %110, %109 : vector<2x96xf32>
    %112 = arith.divf %110, %111 : vector<2x96xf32>
    %113 = vector.extract_strided_slice %106 {offsets = [0, 96], sizes = [2, 32], strides = [1, 1]} : vector<2x128xf32> to vector<2x32xf32>
    %114 = math.tanh %113 : vector<2x32xf32>
    %115 = vector.extract_strided_slice %112 {offsets = [0, 0], sizes = [2, 32], strides = [1, 1]} : vector<2x96xf32> to vector<2x32xf32>
    %116 = vector.extract_strided_slice %112 {offsets = [0, 32], sizes = [2, 32], strides = [1, 1]} : vector<2x96xf32> to vector<2x32xf32>
    %117 = vector.extract_strided_slice %112 {offsets = [0, 64], sizes = [2, 32], strides = [1, 1]} : vector<2x96xf32> to vector<2x32xf32>
    %118 = arith.mulf %116, %102 : vector<2x32xf32>
    %119 = arith.mulf %115, %114 : vector<2x32xf32>
    %120 = arith.addf %118, %119 : vector<2x32xf32>
    %121 = math.tanh %120 : vector<2x32xf32>
    %122 = arith.mulf %117, %121 : vector<2x32xf32>
    %123 = vector.extract_strided_slice %100 {offsets = [0, 1, 0], sizes = [2, 1, 128], strides = [1, 1, 1]} : vector<2x8x128xf32> to vector<2x1x128xf32>
    %124 = vector.shape_cast %123 : vector<2x1x128xf32> to vector<2x128xf32>
    %cst_112 = arith.constant dense<0.000000e+00> : vector<2x128xf32>
    %125 = tpu.matmul %122, %94, %cst_112 {dimension_numbers = #tpu.dot_dimension_numbers<[1], [0], [0], [1], [0, 0, 1, 1], [], []>} : vector<2x32xf32>, vector<32x128xf32>, vector<2x128xf32> -> vector<2x128xf32>
    %126 = arith.addf %124, %125 : vector<2x128xf32>
    %127 = vector.extract_strided_slice %126 {offsets = [0, 0], sizes = [2, 96], strides = [1, 1]} : vector<2x128xf32> to vector<2x96xf32>
    %128 = arith.negf %127 : vector<2x96xf32>
    %129 = math.exp %128 : vector<2x96xf32>
    %cst_113 = arith.constant 1.000000e+00 : f32
    %130 = vector.broadcast %cst_113 : f32 to vector<2x96xf32>
    %131 = arith.addf %130, %129 : vector<2x96xf32>
    %132 = arith.divf %130, %131 : vector<2x96xf32>
    %133 = vector.extract_strided_slice %126 {offsets = [0, 96], sizes = [2, 32], strides = [1, 1]} : vector<2x128xf32> to vector<2x32xf32>
    %134 = math.tanh %133 : vector<2x32xf32>
    %135 = vector.extract_strided_slice %132 {offsets = [0, 0], sizes = [2, 32], strides = [1, 1]} : vector<2x96xf32> to vector<2x32xf32>
    %136 = vector.extract_strided_slice %132 {offsets = [0, 32], sizes = [2, 32], strides = [1, 1]} : vector<2x96xf32> to vector<2x32xf32>
    %137 = vector.extract_strided_slice %132 {offsets = [0, 64], sizes = [2, 32], strides = [1, 1]} : vector<2x96xf32> to vector<2x32xf32>
    %138 = arith.mulf %136, %120 : vector<2x32xf32>
    %139 = arith.mulf %135, %134 : vector<2x32xf32>
    %140 = arith.addf %138, %139 : vector<2x32xf32>
    %141 = math.tanh %140 : vector<2x32xf32>
    %142 = arith.mulf %137, %141 : vector<2x32xf32>
    %143 = vector.extract_strided_slice %100 {offsets = [0, 2, 0], sizes = [2, 1, 128], strides = [1, 1, 1]} : vector<2x8x128xf32> to vector<2x1x128xf32>
    %144 = vector.shape_cast %143 : vector<2x1x128xf32> to vector<2x128xf32>
    %cst_114 = arith.constant dense<0.000000e+00> : vector<2x128xf32>
    %145 = tpu.matmul %142, %94, %cst_114 {dimension_numbers = #tpu.dot_dimension_numbers<[1], [0], [0], [1], [0, 0, 1, 1], [], []>} : vector<2x32xf32>, vector<32x128xf32>, vector<2x128xf32> -> vector<2x128xf32>
    %146 = arith.addf %144, %145 : vector<2x128xf32>
    %147 = vector.extract_strided_slice %146 {offsets = [0, 0], sizes = [2, 96], strides = [1, 1]} : vector<2x128xf32> to vector<2x96xf32>
    %148 = arith.negf %147 : vector<2x96xf32>
    %149 = math.exp %148 : vector<2x96xf32>
    %cst_115 = arith.constant 1.000000e+00 : f32
    %150 = vector.broadcast %cst_115 : f32 to vector<2x96xf32>
    %151 = arith.addf %150, %149 : vector<2x96xf32>
    %152 = arith.divf %150, %151 : vector<2x96xf32>
    %153 = vector.extract_strided_slice %146 {offsets = [0, 96], sizes = [2, 32], strides = [1, 1]} : vector<2x128xf32> to vector<2x32xf32>
    %154 = math.tanh %153 : vector<2x32xf32>
    %155 = vector.extract_strided_slice %152 {offsets = [0, 0], sizes = [2, 32], strides = [1, 1]} : vector<2x96xf32> to vector<2x32xf32>
    %156 = vector.extract_strided_slice %152 {offsets = [0, 32], sizes = [2, 32], strides = [1, 1]} : vector<2x96xf32> to vector<2x32xf32>
    %157 = vector.extract_strided_slice %152 {offsets = [0, 64], sizes = [2, 32], strides = [1, 1]} : vector<2x96xf32> to vector<2x32xf32>
    %158 = arith.mulf %156, %140 : vector<2x32xf32>
    %159 = arith.mulf %155, %154 : vector<2x32xf32>
    %160 = arith.addf %158, %159 : vector<2x32xf32>
    %161 = math.tanh %160 : vector<2x32xf32>
    %162 = arith.mulf %157, %161 : vector<2x32xf32>
    %163 = vector.extract_strided_slice %100 {offsets = [0, 3, 0], sizes = [2, 1, 128], strides = [1, 1, 1]} : vector<2x8x128xf32> to vector<2x1x128xf32>
    %164 = vector.shape_cast %163 : vector<2x1x128xf32> to vector<2x128xf32>
    %cst_116 = arith.constant dense<0.000000e+00> : vector<2x128xf32>
    %165 = tpu.matmul %162, %94, %cst_116 {dimension_numbers = #tpu.dot_dimension_numbers<[1], [0], [0], [1], [0, 0, 1, 1], [], []>} : vector<2x32xf32>, vector<32x128xf32>, vector<2x128xf32> -> vector<2x128xf32>
    %166 = arith.addf %164, %165 : vector<2x128xf32>
    %167 = vector.extract_strided_slice %166 {offsets = [0, 0], sizes = [2, 96], strides = [1, 1]} : vector<2x128xf32> to vector<2x96xf32>
    %168 = arith.negf %167 : vector<2x96xf32>
    %169 = math.exp %168 : vector<2x96xf32>
    %cst_117 = arith.constant 1.000000e+00 : f32
    %170 = vector.broadcast %cst_117 : f32 to vector<2x96xf32>
    %171 = arith.addf %170, %169 : vector<2x96xf32>
    %172 = arith.divf %170, %171 : vector<2x96xf32>
    %173 = vector.extract_strided_slice %166 {offsets = [0, 96], sizes = [2, 32], strides = [1, 1]} : vector<2x128xf32> to vector<2x32xf32>
    %174 = math.tanh %173 : vector<2x32xf32>
    %175 = vector.extract_strided_slice %172 {offsets = [0, 0], sizes = [2, 32], strides = [1, 1]} : vector<2x96xf32> to vector<2x32xf32>
    %176 = vector.extract_strided_slice %172 {offsets = [0, 32], sizes = [2, 32], strides = [1, 1]} : vector<2x96xf32> to vector<2x32xf32>
    %177 = vector.extract_strided_slice %172 {offsets = [0, 64], sizes = [2, 32], strides = [1, 1]} : vector<2x96xf32> to vector<2x32xf32>
    %178 = arith.mulf %176, %160 : vector<2x32xf32>
    %179 = arith.mulf %175, %174 : vector<2x32xf32>
    %180 = arith.addf %178, %179 : vector<2x32xf32>
    %181 = math.tanh %180 : vector<2x32xf32>
    %182 = arith.mulf %177, %181 : vector<2x32xf32>
    %183 = vector.extract_strided_slice %100 {offsets = [0, 4, 0], sizes = [2, 1, 128], strides = [1, 1, 1]} : vector<2x8x128xf32> to vector<2x1x128xf32>
    %184 = vector.shape_cast %183 : vector<2x1x128xf32> to vector<2x128xf32>
    %cst_118 = arith.constant dense<0.000000e+00> : vector<2x128xf32>
    %185 = tpu.matmul %182, %94, %cst_118 {dimension_numbers = #tpu.dot_dimension_numbers<[1], [0], [0], [1], [0, 0, 1, 1], [], []>} : vector<2x32xf32>, vector<32x128xf32>, vector<2x128xf32> -> vector<2x128xf32>
    %186 = arith.addf %184, %185 : vector<2x128xf32>
    %187 = vector.extract_strided_slice %186 {offsets = [0, 0], sizes = [2, 96], strides = [1, 1]} : vector<2x128xf32> to vector<2x96xf32>
    %188 = arith.negf %187 : vector<2x96xf32>
    %189 = math.exp %188 : vector<2x96xf32>
    %cst_119 = arith.constant 1.000000e+00 : f32
    %190 = vector.broadcast %cst_119 : f32 to vector<2x96xf32>
    %191 = arith.addf %190, %189 : vector<2x96xf32>
    %192 = arith.divf %190, %191 : vector<2x96xf32>
    %193 = vector.extract_strided_slice %186 {offsets = [0, 96], sizes = [2, 32], strides = [1, 1]} : vector<2x128xf32> to vector<2x32xf32>
    %194 = math.tanh %193 : vector<2x32xf32>
    %195 = vector.extract_strided_slice %192 {offsets = [0, 0], sizes = [2, 32], strides = [1, 1]} : vector<2x96xf32> to vector<2x32xf32>
    %196 = vector.extract_strided_slice %192 {offsets = [0, 32], sizes = [2, 32], strides = [1, 1]} : vector<2x96xf32> to vector<2x32xf32>
    %197 = vector.extract_strided_slice %192 {offsets = [0, 64], sizes = [2, 32], strides = [1, 1]} : vector<2x96xf32> to vector<2x32xf32>
    %198 = arith.mulf %196, %180 : vector<2x32xf32>
    %199 = arith.mulf %195, %194 : vector<2x32xf32>
    %200 = arith.addf %198, %199 : vector<2x32xf32>
    %201 = math.tanh %200 : vector<2x32xf32>
    %202 = arith.mulf %197, %201 : vector<2x32xf32>
    %203 = vector.extract_strided_slice %100 {offsets = [0, 5, 0], sizes = [2, 1, 128], strides = [1, 1, 1]} : vector<2x8x128xf32> to vector<2x1x128xf32>
    %204 = vector.shape_cast %203 : vector<2x1x128xf32> to vector<2x128xf32>
    %cst_120 = arith.constant dense<0.000000e+00> : vector<2x128xf32>
    %205 = tpu.matmul %202, %94, %cst_120 {dimension_numbers = #tpu.dot_dimension_numbers<[1], [0], [0], [1], [0, 0, 1, 1], [], []>} : vector<2x32xf32>, vector<32x128xf32>, vector<2x128xf32> -> vector<2x128xf32>
    %206 = arith.addf %204, %205 : vector<2x128xf32>
    %207 = vector.extract_strided_slice %206 {offsets = [0, 0], sizes = [2, 96], strides = [1, 1]} : vector<2x128xf32> to vector<2x96xf32>
    %208 = arith.negf %207 : vector<2x96xf32>
    %209 = math.exp %208 : vector<2x96xf32>
    %cst_121 = arith.constant 1.000000e+00 : f32
    %210 = vector.broadcast %cst_121 : f32 to vector<2x96xf32>
    %211 = arith.addf %210, %209 : vector<2x96xf32>
    %212 = arith.divf %210, %211 : vector<2x96xf32>
    %213 = vector.extract_strided_slice %206 {offsets = [0, 96], sizes = [2, 32], strides = [1, 1]} : vector<2x128xf32> to vector<2x32xf32>
    %214 = math.tanh %213 : vector<2x32xf32>
    %215 = vector.extract_strided_slice %212 {offsets = [0, 0], sizes = [2, 32], strides = [1, 1]} : vector<2x96xf32> to vector<2x32xf32>
    %216 = vector.extract_strided_slice %212 {offsets = [0, 32], sizes = [2, 32], strides = [1, 1]} : vector<2x96xf32> to vector<2x32xf32>
    %217 = vector.extract_strided_slice %212 {offsets = [0, 64], sizes = [2, 32], strides = [1, 1]} : vector<2x96xf32> to vector<2x32xf32>
    %218 = arith.mulf %216, %200 : vector<2x32xf32>
    %219 = arith.mulf %215, %214 : vector<2x32xf32>
    %220 = arith.addf %218, %219 : vector<2x32xf32>
    %221 = math.tanh %220 : vector<2x32xf32>
    %222 = arith.mulf %217, %221 : vector<2x32xf32>
    %223 = vector.extract_strided_slice %100 {offsets = [0, 6, 0], sizes = [2, 1, 128], strides = [1, 1, 1]} : vector<2x8x128xf32> to vector<2x1x128xf32>
    %224 = vector.shape_cast %223 : vector<2x1x128xf32> to vector<2x128xf32>
    %cst_122 = arith.constant dense<0.000000e+00> : vector<2x128xf32>
    %225 = tpu.matmul %222, %94, %cst_122 {dimension_numbers = #tpu.dot_dimension_numbers<[1], [0], [0], [1], [0, 0, 1, 1], [], []>} : vector<2x32xf32>, vector<32x128xf32>, vector<2x128xf32> -> vector<2x128xf32>
    %226 = arith.addf %224, %225 : vector<2x128xf32>
    %227 = vector.extract_strided_slice %226 {offsets = [0, 0], sizes = [2, 96], strides = [1, 1]} : vector<2x128xf32> to vector<2x96xf32>
    %228 = arith.negf %227 : vector<2x96xf32>
    %229 = math.exp %228 : vector<2x96xf32>
    %cst_123 = arith.constant 1.000000e+00 : f32
    %230 = vector.broadcast %cst_123 : f32 to vector<2x96xf32>
    %231 = arith.addf %230, %229 : vector<2x96xf32>
    %232 = arith.divf %230, %231 : vector<2x96xf32>
    %233 = vector.extract_strided_slice %226 {offsets = [0, 96], sizes = [2, 32], strides = [1, 1]} : vector<2x128xf32> to vector<2x32xf32>
    %234 = math.tanh %233 : vector<2x32xf32>
    %235 = vector.extract_strided_slice %232 {offsets = [0, 0], sizes = [2, 32], strides = [1, 1]} : vector<2x96xf32> to vector<2x32xf32>
    %236 = vector.extract_strided_slice %232 {offsets = [0, 32], sizes = [2, 32], strides = [1, 1]} : vector<2x96xf32> to vector<2x32xf32>
    %237 = vector.extract_strided_slice %232 {offsets = [0, 64], sizes = [2, 32], strides = [1, 1]} : vector<2x96xf32> to vector<2x32xf32>
    %238 = arith.mulf %236, %220 : vector<2x32xf32>
    %239 = arith.mulf %235, %234 : vector<2x32xf32>
    %240 = arith.addf %238, %239 : vector<2x32xf32>
    %241 = math.tanh %240 : vector<2x32xf32>
    %242 = arith.mulf %237, %241 : vector<2x32xf32>
    %243 = vector.extract_strided_slice %100 {offsets = [0, 7, 0], sizes = [2, 1, 128], strides = [1, 1, 1]} : vector<2x8x128xf32> to vector<2x1x128xf32>
    %244 = vector.shape_cast %243 : vector<2x1x128xf32> to vector<2x128xf32>
    %cst_124 = arith.constant dense<0.000000e+00> : vector<2x128xf32>
    %245 = tpu.matmul %242, %94, %cst_124 {dimension_numbers = #tpu.dot_dimension_numbers<[1], [0], [0], [1], [0, 0, 1, 1], [], []>} : vector<2x32xf32>, vector<32x128xf32>, vector<2x128xf32> -> vector<2x128xf32>
    %246 = arith.addf %244, %245 : vector<2x128xf32>
    %247 = vector.extract_strided_slice %246 {offsets = [0, 0], sizes = [2, 96], strides = [1, 1]} : vector<2x128xf32> to vector<2x96xf32>
    %248 = arith.negf %247 : vector<2x96xf32>
    %249 = math.exp %248 : vector<2x96xf32>
    %cst_125 = arith.constant 1.000000e+00 : f32
    %250 = vector.broadcast %cst_125 : f32 to vector<2x96xf32>
    %251 = arith.addf %250, %249 : vector<2x96xf32>
    %252 = arith.divf %250, %251 : vector<2x96xf32>
    %253 = vector.extract_strided_slice %246 {offsets = [0, 96], sizes = [2, 32], strides = [1, 1]} : vector<2x128xf32> to vector<2x32xf32>
    %254 = math.tanh %253 : vector<2x32xf32>
    %255 = vector.extract_strided_slice %252 {offsets = [0, 0], sizes = [2, 32], strides = [1, 1]} : vector<2x96xf32> to vector<2x32xf32>
    %256 = vector.extract_strided_slice %252 {offsets = [0, 32], sizes = [2, 32], strides = [1, 1]} : vector<2x96xf32> to vector<2x32xf32>
    %257 = vector.extract_strided_slice %252 {offsets = [0, 64], sizes = [2, 32], strides = [1, 1]} : vector<2x96xf32> to vector<2x32xf32>
    %258 = arith.mulf %256, %240 : vector<2x32xf32>
    %259 = arith.mulf %255, %254 : vector<2x32xf32>
    %260 = arith.addf %258, %259 : vector<2x32xf32>
    %261 = math.tanh %260 : vector<2x32xf32>
    %262 = arith.mulf %257, %261 : vector<2x32xf32>
    %c0_126 = arith.constant 0 : index
    %c0_127 = arith.constant 0 : index
    %263 = vector.load %arg16[%c0_126, %c0_127] : memref<2x32xf32, #tpu.memory_space<vmem>>, vector<2x32xf32>
    tpu.vector_store %arg16[%c0_126, %c0_127], %262 {strides = array<i32>} : memref<2x32xf32, #tpu.memory_space<vmem>>, vector<2x32xf32>,
    return
  }
}

</mosaic_0001>

<llo_original>
// kernel: tpu_custom_call.1
$region0: #{tpu_custom_call.1}
  #allocation0 [shape = 'u32[]', space=smem, size = 0x4, offset = 0x4, fixed_abs, tag = 'smem constant byte address 0x4 - core index']
  #allocation1 [shape = 'u32[144,128]{1,0:T(1,128)}', space=vmem, size = 0x12000, scoped, tag = 'internal scratch']
  #allocation2 [shape = 'f32[2,8,224]{2,1,0:T(8,128)}', space=vmem, size = 0x4000, scoped, tag = 'scratch operand']
  %s0 = inlined_call_operand.vmem [shape: f32[2,8,4], index: 0, kind: input, shape index: {}]
  %s1 = inlined_call_operand.vmem [shape: f32[224,96], index: 1, kind: input, shape index: {}]
  %s2 = inlined_call_operand.vmem [shape: f32[1,96], index: 2, kind: input, shape index: {}]
  %s3 = inlined_call_operand.vmem [shape: f32[96,32], index: 3, kind: input, shape index: {}]
  %s4 = inlined_call_operand.vmem [shape: f32[1,32], index: 4, kind: input, shape index: {}]
  %s5 = inlined_call_operand.vmem [shape: f32[224,96], index: 5, kind: input, shape index: {}]
  %s6 = inlined_call_operand.vmem [shape: f32[1,96], index: 6, kind: input, shape index: {}]
  %s7 = inlined_call_operand.vmem [shape: f32[96,32], index: 7, kind: input, shape index: {}]
  %s8 = inlined_call_operand.vmem [shape: f32[1,32], index: 8, kind: input, shape index: {}]
  %s9 = inlined_call_operand.vmem [shape: f32[224,96], index: 9, kind: input, shape index: {}]
  %s10 = inlined_call_operand.vmem [shape: f32[1,96], index: 10, kind: input, shape index: {}]
  %s11 = inlined_call_operand.vmem [shape: f32[96,32], index: 11, kind: input, shape index: {}]
  %s12 = inlined_call_operand.vmem [shape: f32[1,32], index: 12, kind: input, shape index: {}]
  %s13 = inlined_call_operand.vmem [shape: f32[32,128], index: 13, kind: input, shape index: {}]
  %s14 = inlined_call_operand.vmem [shape: f32[32,128], index: 14, kind: input, shape index: {}]
  %s15 = inlined_call_operand.vmem [shape: f32[1,128], index: 15, kind: input, shape index: {}]
  %s16 = inlined_call_operand.hbm [shape: f32[2,32], index: 16, kind: output, shape index: {}]
  %s17 = sld [smem:[#allocation0]]
  $region74: #{tpu_custom_call.1} parent=0
    _
  %s19 = ssub.s32 1, %s17
  %s20 = scalar_select 0, %s19, %s17
  $region1: #{tpu_custom_call.1} parent=0
    #allocation3 [shape = 'u8[1024]{0}', space=vmem, size = 0x400, scoped, tag = 'output window, operand 0, single buffered']
    #allocation4 [shape = 's32[1]{0}', space=sflag, size = 0x4, scoped, tag = 'scoped memory for tpu_custom_call.1']
    %21 = vsyncpa [#allocation4], 0
    // Predicated region
    $region2: #{tpu_custom_call.1} parent=1 // pred_check
      _
    $region3: #{tpu_custom_call.1} parent=1 // pred_check_branch
      %23 = sbr.rel (0) target = $region5
    $region4: #{tpu_custom_call.1} parent=1 // pred_region
      _
    $region5: #{tpu_custom_call.1} parent=1 // pred_fallthru
      _
    // Predicated region
    $region6: #{tpu_custom_call.1} parent=1 // pred_check
      _
    $region7: #{tpu_custom_call.1} parent=1 // pred_check_branch
      %25 = sbr.rel (0) target = $region9
    $region8: #{tpu_custom_call.1} parent=1 // pred_region
      _
    $region9: #{tpu_custom_call.1} parent=1 // pred_fallthru
      _
    // Predicated region
    $region10: #{tpu_custom_call.1} parent=1 // pred_check
      _
    $region11: #{tpu_custom_call.1} parent=1 // pred_check_branch
      %27 = sbr.rel (0) target = $region13
    $region12: #{tpu_custom_call.1} parent=1 // pred_region
      _
    $region13: #{tpu_custom_call.1} parent=1 // pred_fallthru
      _
    // Predicated region
    $region14: #{tpu_custom_call.1} parent=1 // pred_check
      _
    $region15: #{tpu_custom_call.1} parent=1 // pred_check_branch
      %29 = sbr.rel (0) target = $region17
    $region16: #{tpu_custom_call.1} parent=1 // pred_region
      _
    $region17: #{tpu_custom_call.1} parent=1 // pred_fallthru
      _
    // Predicated region
    $region18: #{tpu_custom_call.1} parent=1 // pred_check
      _
    $region19: #{tpu_custom_call.1} parent=1 // pred_check_branch
      %31 = sbr.rel (0) target = $region21
    $region20: #{tpu_custom_call.1} parent=1 // pred_region
      _
    $region21: #{tpu_custom_call.1} parent=1 // pred_fallthru
      _
    // Predicated region
    $region22: #{tpu_custom_call.1} parent=1 // pred_check
      _
    $region23: #{tpu_custom_call.1} parent=1 // pred_check_branch
      %33 = sbr.rel (0) target = $region25
    $region24: #{tpu_custom_call.1} parent=1 // pred_region
      _
    $region25: #{tpu_custom_call.1} parent=1 // pred_fallthru
      _
    // Predicated region
    $region26: #{tpu_custom_call.1} parent=1 // pred_check
      _
    $region27: #{tpu_custom_call.1} parent=1 // pred_check_branch
      %35 = sbr.rel (0) target = $region29
    $region28: #{tpu_custom_call.1} parent=1 // pred_region
      _
    $region29: #{tpu_custom_call.1} parent=1 // pred_fallthru
      _
    // Predicated region
    $region30: #{tpu_custom_call.1} parent=1 // pred_check
      _
    $region31: #{tpu_custom_call.1} parent=1 // pred_check_branch
      %37 = sbr.rel (0) target = $region33
    $region32: #{tpu_custom_call.1} parent=1 // pred_region
      _
    $region33: #{tpu_custom_call.1} parent=1 // pred_fallthru
      _
    // Predicated region
    $region34: #{tpu_custom_call.1} parent=1 // pred_check
      _
    $region35: #{tpu_custom_call.1} parent=1 // pred_check_branch
      %39 = sbr.rel (0) target = $region37
    $region36: #{tpu_custom_call.1} parent=1 // pred_region
      _
    $region37: #{tpu_custom_call.1} parent=1 // pred_fallthru
      _
    // Predicated region
    $region38: #{tpu_custom_call.1} parent=1 // pred_check
      _
    $region39: #{tpu_custom_call.1} parent=1 // pred_check_branch
      %41 = sbr.rel (0) target = $region41
    $region40: #{tpu_custom_call.1} parent=1 // pred_region
      _
    $region41: #{tpu_custom_call.1} parent=1 // pred_fallthru
      _
    // Predicated region
    $region42: #{tpu_custom_call.1} parent=1 // pred_check
      _
    $region43: #{tpu_custom_call.1} parent=1 // pred_check_branch
      %43 = sbr.rel (0) target = $region45
    $region44: #{tpu_custom_call.1} parent=1 // pred_region
      _
    $region45: #{tpu_custom_call.1} parent=1 // pred_fallthru
      _
    // Predicated region
    $region46: #{tpu_custom_call.1} parent=1 // pred_check
      _
    $region47: #{tpu_custom_call.1} parent=1 // pred_check_branch
      %45 = sbr.rel (0) target = $region49
    $region48: #{tpu_custom_call.1} parent=1 // pred_region
      _
    $region49: #{tpu_custom_call.1} parent=1 // pred_fallthru
      _
    // Predicated region
    $region50: #{tpu_custom_call.1} parent=1 // pred_check
      _
    $region51: #{tpu_custom_call.1} parent=1 // pred_check_branch
      %47 = sbr.rel (0) target = $region53
    $region52: #{tpu_custom_call.1} parent=1 // pred_region
      _
    $region53: #{tpu_custom_call.1} parent=1 // pred_fallthru
      _
    // Predicated region
    $region54: #{tpu_custom_call.1} parent=1 // pred_check
      _
    $region55: #{tpu_custom_call.1} parent=1 // pred_check_branch
      %49 = sbr.rel (0) target = $region57
    $region56: #{tpu_custom_call.1} parent=1 // pred_region
      _
    $region57: #{tpu_custom_call.1} parent=1 // pred_fallthru
      _
    // Predicated region
    $region58: #{tpu_custom_call.1} parent=1 // pred_check
      _
    $region59: #{tpu_custom_call.1} parent=1 // pred_check_branch
      %51 = sbr.rel (0) target = $region61
    $region60: #{tpu_custom_call.1} parent=1 // pred_region
      _
    $region61: #{tpu_custom_call.1} parent=1 // pred_fallthru
      _
    // Predicated region
    $region62: #{tpu_custom_call.1} parent=1 // pred_check
      _
    $region63: #{tpu_custom_call.1} parent=1 // pred_check_branch
      %53 = sbr.rel (0) target = $region65
    $region64: #{tpu_custom_call.1} parent=1 // pred_region
      _
    $region65: #{tpu_custom_call.1} parent=1 // pred_fallthru
      _
    %54 = vst [vmem:[#allocation2] sm:$0xff] 0.0
    %vm55 = vcmask 785408
    %56 = vst.msk [vmem:[#allocation2 + $0x8] sm:$0xff] %vm55, 0.0
    %57 = vst [vmem:[#allocation2 + $0x10] sm:$0xff] 0.0
    %58 = vst.msk [vmem:[#allocation2 + $0x18] sm:$0xff] %vm55, 0.0
    %v59 = vld [vmem:[%s0] sm:$0xff]
    %v60 = vld [vmem:[%s0 + $0x8] sm:$0xff]
    %v61 = vld [vmem:[%s1] sm:$0xff]
    %v62 = vld [vmem:[%s1 + $0x8] sm:$0xff]
    %v63 = vld [vmem:[%s1 + $0x10] sm:$0xff]
    %v64 = vld [vmem:[%s1 + $0x18] sm:$0xff]
    %v65 = vld [vmem:[%s1 + $0x20] sm:$0xff]
    %v66 = vld [vmem:[%s1 + $0x28] sm:$0xff]
    %v67 = vld [vmem:[%s1 + $0x30] sm:$0xff]
    %v68 = vld [vmem:[%s1 + $0x38] sm:$0xff]
    %v69 = vld [vmem:[%s1 + $0x40] sm:$0xff]
    %v70 = vld [vmem:[%s1 + $0x48] sm:$0xff]
    %v71 = vld [vmem:[%s1 + $0x50] sm:$0xff]
    %v72 = vld [vmem:[%s1 + $0x58] sm:$0xff]
    %v73 = vld [vmem:[%s1 + $0x60] sm:$0xff]
    %v74 = vld [vmem:[%s1 + $0x68] sm:$0xff]
    %v75 = vld [vmem:[%s1 + $0x70] sm:$0xff]
    %v76 = vld [vmem:[%s1 + $0x78] sm:$0xff]
    %v77 = vld [vmem:[%s1 + $0x80] sm:$0xff]
    %v78 = vld [vmem:[%s1 + $0x88] sm:$0xff]
    %v79 = vld [vmem:[%s1 + $0x90] sm:$0xff]
    %v80 = vld [vmem:[%s1 + $0x98] sm:$0xff]
    %v81 = vld [vmem:[%s1 + $0xa0] sm:$0xff]
    %v82 = vld [vmem:[%s1 + $0xa8] sm:$0xff]
    %v83 = vld [vmem:[%s1 + $0xb0] sm:$0xff]
    %v84 = vld [vmem:[%s1 + $0xb8] sm:$0xff]
    %v85 = vld [vmem:[%s1 + $0xc0] sm:$0xff]
    %v86 = vld [vmem:[%s1 + $0xc8] sm:$0xff]
    %v87 = vld [vmem:[%s1 + $0xd0] sm:$0xff]
    %v88 = vld [vmem:[%s1 + $0xd8] sm:$0xff]
    %v89 = vld [vmem:[%s2] sm:$0x1]
    %v90 = vld [vmem:[%s3] sm:$0xff]
    %v91 = vld [vmem:[%s3 + $0x8] sm:$0xff]
    %v92 = vld [vmem:[%s3 + $0x10] sm:$0xff]
    %v93 = vld [vmem:[%s3 + $0x18] sm:$0xff]
    %v94 = vld [vmem:[%s3 + $0x20] sm:$0xff]
    %v95 = vld [vmem:[%s3 + $0x28] sm:$0xff]
    %v96 = vld [vmem:[%s3 + $0x30] sm:$0xff]
    %v97 = vld [vmem:[%s3 + $0x38] sm:$0xff]
    %v98 = vld [vmem:[%s3 + $0x40] sm:$0xff]
    %v99 = vld [vmem:[%s3 + $0x48] sm:$0xff]
    %v100 = vld [vmem:[%s3 + $0x50] sm:$0xff]
    %v101 = vld [vmem:[%s3 + $0x58] sm:$0xff]
    %v102 = vld [vmem:[%s4] sm:$0x1]
    %vm103 = vcmask 31744
    %104 = vst.msk [vmem:[#allocation2] sm:$0xff] %vm103, %v59
    %105 = vst.msk [vmem:[#allocation2 + $0x10] sm:$0xff] %vm103, %v60
    %v108 = vrot.slane %v59, 7
    %v109 = vrot.slane %v60, 7
    %110 = vrot.lane.b32.xlu0 %v108, 32
    %v111 = vpop.permute.xlu0 %110
    %112 = vrot.lane.b32.xlu0 %v109, 32
    %v113 = vpop.permute.xlu0 %112
    %vm116 = vcmask 294145
    %117 = vst.msk [vmem:[#allocation2] sm:$0xfe] %vm116, %v111
    %118 = vst.msk [vmem:[#allocation2 + $0x10] sm:$0xfe] %vm116, %v113
    %v119 = vrot.slane %v59, 6
    %v120 = vrot.slane %v60, 6
    %121 = vrot.lane.b32.xlu0 %v119, 64
    %v122 = vpop.permute.xlu0 %121
    %123 = vrot.lane.b32.xlu0 %v120, 64
    %v124 = vpop.permute.xlu0 %123
    %vm127 = vcmask 556546
    %128 = vst.msk [vmem:[#allocation2] sm:$0xfc] %vm127, %v122
    %129 = vst.msk [vmem:[#allocation2 + $0x10] sm:$0xfc] %vm127, %v124
    %v130 = vrot.slane %v59, 5
    %v131 = vrot.slane %v60, 5
    %132 = vrot.lane.b32.xlu0 %v130, 96
    %v133 = vpop.permute.xlu0 %132
    %134 = vrot.lane.b32.xlu0 %v131, 96
    %v135 = vpop.permute.xlu0 %134
    %vm138 = vcmask 818947
    %139 = vst.msk [vmem:[#allocation2] sm:$0xf8] %vm138, %v133
    %140 = vst.msk [vmem:[#allocation2 + $0x10] sm:$0xf8] %vm138, %v135
    %v141 = vrot.slane %v59, 4
    %v142 = vrot.slane %v60, 4
    %vm145 = vcmask 31748
    %146 = vst.msk [vmem:[#allocation2 + $0x8] sm:$0xf0] %vm145, %v141
    %147 = vst.msk [vmem:[#allocation2 + $0x18] sm:$0xf0] %vm145, %v142
    %v148 = vrot.slane %v59, 3
    %v149 = vrot.slane %v60, 3
    %150 = vrot.lane.b32.xlu0 %v148, 32
    %v151 = vpop.permute.xlu0 %150
    %152 = vrot.lane.b32.xlu0 %v149, 32
    %v153 = vpop.permute.xlu0 %152
    %vm156 = vcmask 294149
    %157 = vst.msk [vmem:[#allocation2 + $0x8] sm:$0xe0] %vm156, %v151
    %158 = vst.msk [vmem:[#allocation2 + $0x18] sm:$0xe0] %vm156, %v153
    %v159 = vrot.slane %v59, 2
    %v160 = vrot.slane %v60, 2
    %161 = vrot.lane.b32.xlu0 %v159, 64
    %v162 = vpop.permute.xlu0 %161
    %163 = vrot.lane.b32.xlu0 %v160, 64
    %v164 = vpop.permute.xlu0 %163
    %vm167 = vcmask 556550
    %168 = vst.msk [vmem:[#allocation2 + $0x8] sm:$0xc0] %vm167, %v162
    %169 = vst.msk [vmem:[#allocation2 + $0x18] sm:$0xc0] %vm167, %v164
    %v170 = vld [vmem:[#allocation2] sm:$0xff]
    %v171 = vld [vmem:[#allocation2 + $0x8] sm:$0xff]
    %v172 = vld [vmem:[#allocation2 + $0x10] sm:$0xff]
    %v173 = vld [vmem:[#allocation2 + $0x18] sm:$0xff]
    %v175 = vlaneseq
    %v176 = vshrl.u32 %v175, 7
    %v177 = vsub.s32 0, %v176
    %v178 = vrot.slane %v89, %v177
    %v181 = vsel %vm55, %v171, 0
    %v184 = vsel %vm55, %v173, 0
    %186 = vmatprep.subr.mxu0 0.0
    %187 = vmatpush1.msra.mxu0 %v76
    %188 = vmatprep.subr.mxu0 0.0
    %189 = vmatpush1.msra.mxu0 %v75
    %190 = vmatprep.subr.mxu0 0.0
    %191 = vmatpush1.msra.mxu0 %v74
    %192 = vmatprep.subr.mxu0 0.0
    %193 = vmatpush1.msra.mxu0 %v73
    %194 = vmatprep.subr.mxu0 0.0
    %195 = vmatpush1.msra.mxu0 %v72
    %196 = vmatprep.subr.mxu0 0.0
    %197 = vmatpush1.msra.mxu0 %v71
    %198 = vmatprep.subr.mxu0 0.0
    %199 = vmatpush1.msra.mxu0 %v70
    %200 = vmatprep.subr.mxu0 0.0
    %201 = vmatpush1.msra.mxu0 %v69
    %202 = vmatprep.subr.mxu0 0.0
    %203 = vmatpush1.msra.mxu0 %v68
    %204 = vmatprep.subr.mxu0 0.0
    %205 = vmatpush1.msra.mxu0 %v67
    %206 = vmatprep.subr.mxu0 0.0
    %207 = vmatpush1.msra.mxu0 %v66
    %208 = vmatprep.subr.mxu0 0.0
    %209 = vmatpush1.msra.mxu0 %v65
    %210 = vmatprep.subr.mxu0 0.0
    %211 = vmatpush1.msra.mxu0 %v64
    %212 = vmatprep.subr.mxu0 0.0
    %213 = vmatpush1.msra.mxu0 %v63
    %214 = vmatprep.subr.mxu0 0.0
    %215 = vmatpush1.msra.mxu0 %v62
    %216 = vmatprep.subr.mxu0 0.0
    %217 = vmatpush1.msra.mxu0 %v61
    %218 = vmatprep.subr.mxu0 0.0
    %219 = vmatpush2.msra.mxu0 0.0
    %220 = vmatprep.subr.mxu0 0.0
    %221 = vmatpush2.msra.mxu0 0.0
    %222 = vmatprep.subr.mxu0 0.0
    %223 = vmatpush2.msra.mxu0 0.0
    %224 = vmatprep.subr.mxu0 0.0
    %225 = vmatpush2.msra.mxu0 0.0
    %226 = vmatprep.subr.mxu0 0.0
    %227 = vmatpush2.msra.mxu0 %v88
    %228 = vmatprep.subr.mxu0 0.0
    %229 = vmatpush2.msra.mxu0 %v87
    %230 = vmatprep.subr.mxu0 0.0
    %231 = vmatpush2.msra.mxu0 %v86
    %232 = vmatprep.subr.mxu0 0.0
    %233 = vmatpush2.msra.mxu0 %v85
    %234 = vmatprep.subr.mxu0 0.0
    %235 = vmatpush2.msra.mxu0 %v84
    %236 = vmatprep.subr.mxu0 0.0
    %237 = vmatpush2.msra.mxu0 %v83
    %238 = vmatprep.subr.mxu0 0.0
    %239 = vmatpush2.msra.mxu0 %v82
    %240 = vmatprep.subr.mxu0 0.0
    %241 = vmatpush2.msra.mxu0 %v81
    %242 = vmatprep.subr.mxu0 0.0
    %243 = vmatpush2.msra.mxu0 %v80
    %244 = vmatprep.subr.mxu0 0.0
    %245 = vmatpush2.msra.mxu0 %v79
    %246 = vmatprep.subr.mxu0 0.0
    %247 = vmatpush2.msra.mxu0 %v78
    %248 = vmatprep.subr.mxu0 0.0
    %249 = vmatpush2.msra.mxu0 %v77
    %250 = vmatprep.mubr.f32.mxu0 %v181
    %251 = vmatmul.mubr.f32.gmra.mxu0 %v170
    %v252 = vpop.f32.mrf.mxu0
    %v253 = vadd.f32 %v178, %v252
    %v254 = vpop.f32.mrf.mxu0
    %255 = vmatprep.mubr.f32.mxu0 %v184
    %256 = vmatmul.mubr.f32.gmra.mxu0 %v172
    %v257 = vpop.f32.mrf.mxu0
    %v258 = vadd.f32 %v178, %v257
    %v259 = vpop.f32.mrf.mxu0
    %260 = vdwg.mxu0
    %v261 = vmax.f32 %v253, 0.0
    %v262 = vmax.f32 %v258, 0.0
    %v264 = vlaneseq
    %v265 = vshrl.u32 %v264, 7
    %v266 = vsub.s32 0, %v265
    %v267 = vrot.slane %v102, %v266
    %v270 = vsel %vm55, %v261, 0
    %v273 = vsel %vm55, %v262, 0
    %275 = vmatprep.subr.mxu0 0.0
    %276 = vmatpush1.msra.mxu0 0.0
    %277 = vmatprep.subr.mxu0 0.0
    %278 = vmatpush1.msra.mxu0 0.0
    %279 = vmatprep.subr.mxu0 0.0
    %280 = vmatpush1.msra.mxu0 0.0
    %281 = vmatprep.subr.mxu0 0.0
    %282 = vmatpush1.msra.mxu0 0.0
    %283 = vmatprep.subr.mxu0 0.0
    %284 = vmatpush1.msra.mxu0 %v101
    %285 = vmatprep.subr.mxu0 0.0
    %286 = vmatpush1.msra.mxu0 %v100
    %287 = vmatprep.subr.mxu0 0.0
    %288 = vmatpush1.msra.mxu0 %v99
    %289 = vmatprep.subr.mxu0 0.0
    %290 = vmatpush1.msra.mxu0 %v98
    %291 = vmatprep.subr.mxu0 0.0
    %292 = vmatpush1.msra.mxu0 %v97
    %293 = vmatprep.subr.mxu0 0.0
    %294 = vmatpush1.msra.mxu0 %v96
    %295 = vmatprep.subr.mxu0 0.0
    %296 = vmatpush1.msra.mxu0 %v95
    %297 = vmatprep.subr.mxu0 0.0
    %298 = vmatpush1.msra.mxu0 %v94
    %299 = vmatprep.subr.mxu0 0.0
    %300 = vmatpush1.msra.mxu0 %v93
    %301 = vmatprep.subr.mxu0 0.0
    %302 = vmatpush1.msra.mxu0 %v92
    %303 = vmatprep.subr.mxu0 0.0
    %304 = vmatpush1.msra.mxu0 %v91
    %305 = vmatprep.subr.mxu0 0.0
    %306 = vmatpush1.msra.mxu0 %v90
    %307 = vmatprep.subr.mxu0 0.0
    %308 = vmatpush2.msra.mxu0 0.0
    %309 = vmatprep.subr.mxu0 0.0
    %310 = vmatpush2.msra.mxu0 0.0
    %311 = vmatprep.subr.mxu0 0.0
    %312 = vmatpush2.msra.mxu0 0.0
    %313 = vmatprep.subr.mxu0 0.0
    %314 = vmatpush2.msra.mxu0 0.0
    %315 = vmatprep.subr.mxu0 0.0
    %316 = vmatpush2.msra.mxu0 0.0
    %317 = vmatprep.subr.mxu0 0.0
    %318 = vmatpush2.msra.mxu0 0.0
    %319 = vmatprep.subr.mxu0 0.0
    %320 = vmatpush2.msra.mxu0 0.0
    %321 = vmatprep.subr.mxu0 0.0
    %322 = vmatpush2.msra.mxu0 0.0
    %323 = vmatprep.subr.mxu0 0.0
    %324 = vmatpush2.msra.mxu0 0.0
    %325 = vmatprep.subr.mxu0 0.0
    %326 = vmatpush2.msra.mxu0 0.0
    %327 = vmatprep.subr.mxu0 0.0
    %328 = vmatpush2.msra.mxu0 0.0
    %329 = vmatprep.subr.mxu0 0.0
    %330 = vmatpush2.msra.mxu0 0.0
    %331 = vmatprep.subr.mxu0 0.0
    %332 = vmatpush2.msra.mxu0 0.0
    %333 = vmatprep.subr.mxu0 0.0
    %334 = vmatpush2.msra.mxu0 0.0
    %335 = vmatprep.subr.mxu0 0.0
    %336 = vmatpush2.msra.mxu0 0.0
    %337 = vmatprep.subr.mxu0 0.0
    %338 = vmatpush2.msra.mxu0 0.0
    %339 = vmatprep.mubr.f32.mxu0 0.0
    %340 = vmatmul.mubr.f32.gmra.mxu0 %v270
    %v341 = vpop.f32.mrf.mxu0
    %v342 = vadd.f32 %v267, %v341
    %v343 = vpop.f32.mrf.mxu0
    %344 = vmatprep.mubr.f32.mxu0 0.0
    %345 = vmatmul.mubr.f32.gmra.mxu0 %v273
    %v346 = vpop.f32.mrf.mxu0
    %v347 = vadd.f32 %v267, %v346
    %v348 = vpop.f32.mrf.mxu0
    %349 = vdwg.mxu0
    %v350 = vmax.f32 %v342, 0.0
    %v351 = vmax.f32 %v347, 0.0
    %v352 = vld [vmem:[%s5] sm:$0xff]
    %v353 = vld [vmem:[%s5 + $0x8] sm:$0xff]
    %v354 = vld [vmem:[%s5 + $0x10] sm:$0xff]
    %v355 = vld [vmem:[%s5 + $0x18] sm:$0xff]
    %v356 = vld [vmem:[%s5 + $0x20] sm:$0xff]
    %v357 = vld [vmem:[%s5 + $0x28] sm:$0xff]
    %v358 = vld [vmem:[%s5 + $0x30] sm:$0xff]
    %v359 = vld [vmem:[%s5 + $0x38] sm:$0xff]
    %v360 = vld [vmem:[%s5 + $0x40] sm:$0xff]
    %v361 = vld [vmem:[%s5 + $0x48] sm:$0xff]
    %v362 = vld [vmem:[%s5 + $0x50] sm:$0xff]
    %v363 = vld [vmem:[%s5 + $0x58] sm:$0xff]
    %v364 = vld [vmem:[%s5 + $0x60] sm:$0xff]
    %v365 = vld [vmem:[%s5 + $0x68] sm:$0xff]
    %v366 = vld [vmem:[%s5 + $0x70] sm:$0xff]
    %v367 = vld [vmem:[%s5 + $0x78] sm:$0xff]
    %v368 = vld [vmem:[%s5 + $0x80] sm:$0xff]
    %v369 = vld [vmem:[%s5 + $0x88] sm:$0xff]
    %v370 = vld [vmem:[%s5 + $0x90] sm:$0xff]
    %v371 = vld [vmem:[%s5 + $0x98] sm:$0xff]
    %v372 = vld [vmem:[%s5 + $0xa0] sm:$0xff]
    %v373 = vld [vmem:[%s5 + $0xa8] sm:$0xff]
    %v374 = vld [vmem:[%s5 + $0xb0] sm:$0xff]
    %v375 = vld [vmem:[%s5 + $0xb8] sm:$0xff]
    %v376 = vld [vmem:[%s5 + $0xc0] sm:$0xff]
    %v377 = vld [vmem:[%s5 + $0xc8] sm:$0xff]
    %v378 = vld [vmem:[%s5 + $0xd0] sm:$0xff]
    %v379 = vld [vmem:[%s5 + $0xd8] sm:$0xff]
    %v380 = vld [vmem:[%s6] sm:$0x1]
    %v381 = vld [vmem:[%s7] sm:$0xff]
    %v382 = vld [vmem:[%s7 + $0x8] sm:$0xff]
    %v383 = vld [vmem:[%s7 + $0x10] sm:$0xff]
    %v384 = vld [vmem:[%s7 + $0x18] sm:$0xff]
    %v385 = vld [vmem:[%s7 + $0x20] sm:$0xff]
    %v386 = vld [vmem:[%s7 + $0x28] sm:$0xff]
    %v387 = vld [vmem:[%s7 + $0x30] sm:$0xff]
    %v388 = vld [vmem:[%s7 + $0x38] sm:$0xff]
    %v389 = vld [vmem:[%s7 + $0x40] sm:$0xff]
    %v390 = vld [vmem:[%s7 + $0x48] sm:$0xff]
    %v391 = vld [vmem:[%s7 + $0x50] sm:$0xff]
    %v392 = vld [vmem:[%s7 + $0x58] sm:$0xff]
    %v393 = vld [vmem:[%s8] sm:$0x1]
    %vm394 = vcmask 261120
    %395 = vst.msk [vmem:[#allocation2] sm:$0xff] %vm394, %v350
    %396 = vst.msk [vmem:[#allocation2 + $0x10] sm:$0xff] %vm394, %v351
    %v399 = vrot.slane %v350, 7
    %v400 = vrot.slane %v351, 7
    %401 = vrot.lane.b32.xlu0 %v399, 32
    %v402 = vpop.permute.xlu0 %401
    %403 = vrot.lane.b32.xlu0 %v400, 32
    %v404 = vpop.permute.xlu0 %403
    %vm407 = vcmask 523521
    %408 = vst.msk [vmem:[#allocation2] sm:$0xfe] %vm407, %v402
    %409 = vst.msk [vmem:[#allocation2 + $0x10] sm:$0xfe] %vm407, %v404
    %v410 = vrot.slane %v350, 6
    %v411 = vrot.slane %v351, 6
    %412 = vrot.lane.b32.xlu0 %v410, 64
    %v413 = vpop.permute.xlu0 %412
    %414 = vrot.lane.b32.xlu0 %v411, 64
    %v415 = vpop.permute.xlu0 %414
    %vm418 = vcmask 785922
    %419 = vst.msk [vmem:[#allocation2] sm:$0xfc] %vm418, %v413
    %420 = vst.msk [vmem:[#allocation2 + $0x10] sm:$0xfc] %vm418, %v415
    %v421 = vrot.slane %v350, 5
    %v422 = vrot.slane %v351, 5
    %423 = vrot.lane.b32.xlu0 %v421, 96
    %v424 = vpop.permute.xlu0 %423
    %425 = vrot.lane.b32.xlu0 %v422, 96
    %v426 = vpop.permute.xlu0 %425
    %vm429 = vcmask 1048323
    %430 = vst.msk [vmem:[#allocation2] sm:$0xf8] %vm429, %v424
    %431 = vst.msk [vmem:[#allocation2 + $0x10] sm:$0xf8] %vm429, %v426
    %v432 = vrot.slane %v350, 4
    %v433 = vrot.slane %v351, 4
    %vm436 = vcmask 261124
    %437 = vst.msk [vmem:[#allocation2 + $0x8] sm:$0xf0] %vm436, %v432
    %438 = vst.msk [vmem:[#allocation2 + $0x18] sm:$0xf0] %vm436, %v433
    %v439 = vrot.slane %v350, 3
    %v440 = vrot.slane %v351, 3
    %441 = vrot.lane.b32.xlu0 %v439, 32
    %v442 = vpop.permute.xlu0 %441
    %443 = vrot.lane.b32.xlu0 %v440, 32
    %v444 = vpop.permute.xlu0 %443
    %vm447 = vcmask 523525
    %448 = vst.msk [vmem:[#allocation2 + $0x8] sm:$0xe0] %vm447, %v442
    %449 = vst.msk [vmem:[#allocation2 + $0x18] sm:$0xe0] %vm447, %v444
    %v450 = vrot.slane %v350, 2
    %v451 = vrot.slane %v351, 2
    %452 = vrot.lane.b32.xlu0 %v450, 64
    %v453 = vpop.permute.xlu0 %452
    %454 = vrot.lane.b32.xlu0 %v451, 64
    %v455 = vpop.permute.xlu0 %454
    %vm458 = vcmask 785926
    %459 = vst.msk [vmem:[#allocation2 + $0x8] sm:$0xc0] %vm458, %v453
    %460 = vst.msk [vmem:[#allocation2 + $0x18] sm:$0xc0] %vm458, %v455
    %v461 = vld [vmem:[#allocation2] sm:$0xff]
    %v462 = vld [vmem:[#allocation2 + $0x8] sm:$0xff]
    %v463 = vld [vmem:[#allocation2 + $0x10] sm:$0xff]
    %v464 = vld [vmem:[#allocation2 + $0x18] sm:$0xff]
    %v466 = vlaneseq
    %v467 = vshrl.u32 %v466, 7
    %v468 = vsub.s32 0, %v467
    %v469 = vrot.slane %v380, %v468
    %v472 = vsel %vm55, %v462, 0
    %v475 = vsel %vm55, %v464, 0
    %477 = vmatprep.subr.mxu0 0.0
    %478 = vmatpush1.msra.mxu0 %v367
    %479 = vmatprep.subr.mxu0 0.0
    %480 = vmatpush1.msra.mxu0 %v366
    %481 = vmatprep.subr.mxu0 0.0
    %482 = vmatpush1.msra.mxu0 %v365
    %483 = vmatprep.subr.mxu0 0.0
    %484 = vmatpush1.msra.mxu0 %v364
    %485 = vmatprep.subr.mxu0 0.0
    %486 = vmatpush1.msra.mxu0 %v363
    %487 = vmatprep.subr.mxu0 0.0
    %488 = vmatpush1.msra.mxu0 %v362
    %489 = vmatprep.subr.mxu0 0.0
    %490 = vmatpush1.msra.mxu0 %v361
    %491 = vmatprep.subr.mxu0 0.0
    %492 = vmatpush1.msra.mxu0 %v360
    %493 = vmatprep.subr.mxu0 0.0
    %494 = vmatpush1.msra.mxu0 %v359
    %495 = vmatprep.subr.mxu0 0.0
    %496 = vmatpush1.msra.mxu0 %v358
    %497 = vmatprep.subr.mxu0 0.0
    %498 = vmatpush1.msra.mxu0 %v357
    %499 = vmatprep.subr.mxu0 0.0
    %500 = vmatpush1.msra.mxu0 %v356
    %501 = vmatprep.subr.mxu0 0.0
    %502 = vmatpush1.msra.mxu0 %v355
    %503 = vmatprep.subr.mxu0 0.0
    %504 = vmatpush1.msra.mxu0 %v354
    %505 = vmatprep.subr.mxu0 0.0
    %506 = vmatpush1.msra.mxu0 %v353
    %507 = vmatprep.subr.mxu0 0.0
    %508 = vmatpush1.msra.mxu0 %v352
    %509 = vmatprep.subr.mxu0 0.0
    %510 = vmatpush2.msra.mxu0 0.0
    %511 = vmatprep.subr.mxu0 0.0
    %512 = vmatpush2.msra.mxu0 0.0
    %513 = vmatprep.subr.mxu0 0.0
    %514 = vmatpush2.msra.mxu0 0.0
    %515 = vmatprep.subr.mxu0 0.0
    %516 = vmatpush2.msra.mxu0 0.0
    %517 = vmatprep.subr.mxu0 0.0
    %518 = vmatpush2.msra.mxu0 %v379
    %519 = vmatprep.subr.mxu0 0.0
    %520 = vmatpush2.msra.mxu0 %v378
    %521 = vmatprep.subr.mxu0 0.0
    %522 = vmatpush2.msra.mxu0 %v377
    %523 = vmatprep.subr.mxu0 0.0
    %524 = vmatpush2.msra.mxu0 %v376
    %525 = vmatprep.subr.mxu0 0.0
    %526 = vmatpush2.msra.mxu0 %v375
    %527 = vmatprep.subr.mxu0 0.0
    %528 = vmatpush2.msra.mxu0 %v374
    %529 = vmatprep.subr.mxu0 0.0
    %530 = vmatpush2.msra.mxu0 %v373
    %531 = vmatprep.subr.mxu0 0.0
    %532 = vmatpush2.msra.mxu0 %v372
    %533 = vmatprep.subr.mxu0 0.0
    %534 = vmatpush2.msra.mxu0 %v371
    %535 = vmatprep.subr.mxu0 0.0
    %536 = vmatpush2.msra.mxu0 %v370
    %537 = vmatprep.subr.mxu0 0.0
    %538 = vmatpush2.msra.mxu0 %v369
    %539 = vmatprep.subr.mxu0 0.0
    %540 = vmatpush2.msra.mxu0 %v368
    %541 = vmatprep.mubr.f32.mxu0 %v472
    %542 = vmatmul.mubr.f32.gmra.mxu0 %v461
    %v543 = vpop.f32.mrf.mxu0
    %v544 = vadd.f32 %v469, %v543
    %v545 = vpop.f32.mrf.mxu0
    %546 = vmatprep.mubr.f32.mxu0 %v475
    %547 = vmatmul.mubr.f32.gmra.mxu0 %v463
    %v548 = vpop.f32.mrf.mxu0
    %v549 = vadd.f32 %v469, %v548
    %v550 = vpop.f32.mrf.mxu0
    %551 = vdwg.mxu0
    %v552 = vmax.f32 %v544, 0.0
    %v553 = vmax.f32 %v549, 0.0
    %v555 = vlaneseq
    %v556 = vshrl.u32 %v555, 7
    %v557 = vsub.s32 0, %v556
    %v558 = vrot.slane %v393, %v557
    %v561 = vsel %vm55, %v552, 0
    %v564 = vsel %vm55, %v553, 0
    %566 = vmatprep.subr.mxu0 0.0
    %567 = vmatpush1.msra.mxu0 0.0
    %568 = vmatprep.subr.mxu0 0.0
    %569 = vmatpush1.msra.mxu0 0.0
    %570 = vmatprep.subr.mxu0 0.0
    %571 = vmatpush1.msra.mxu0 0.0
    %572 = vmatprep.subr.mxu0 0.0
    %573 = vmatpush1.msra.mxu0 0.0
    %574 = vmatprep.subr.mxu0 0.0
    %575 = vmatpush1.msra.mxu0 %v392
    %576 = vmatprep.subr.mxu0 0.0
    %577 = vmatpush1.msra.mxu0 %v391
    %578 = vmatprep.subr.mxu0 0.0
    %579 = vmatpush1.msra.mxu0 %v390
    %580 = vmatprep.subr.mxu0 0.0
    %581 = vmatpush1.msra.mxu0 %v389
    %582 = vmatprep.subr.mxu0 0.0
    %583 = vmatpush1.msra.mxu0 %v388
    %584 = vmatprep.subr.mxu0 0.0
    %585 = vmatpush1.msra.mxu0 %v387
    %586 = vmatprep.subr.mxu0 0.0
    %587 = vmatpush1.msra.mxu0 %v386
    %588 = vmatprep.subr.mxu0 0.0
    %589 = vmatpush1.msra.mxu0 %v385
    %590 = vmatprep.subr.mxu0 0.0
    %591 = vmatpush1.msra.mxu0 %v384
    %592 = vmatprep.subr.mxu0 0.0
    %593 = vmatpush1.msra.mxu0 %v383
    %594 = vmatprep.subr.mxu0 0.0
    %595 = vmatpush1.msra.mxu0 %v382
    %596 = vmatprep.subr.mxu0 0.0
    %597 = vmatpush1.msra.mxu0 %v381
    %598 = vmatprep.subr.mxu0 0.0
    %599 = vmatpush2.msra.mxu0 0.0
    %600 = vmatprep.subr.mxu0 0.0
    %601 = vmatpush2.msra.mxu0 0.0
    %602 = vmatprep.subr.mxu0 0.0
    %603 = vmatpush2.msra.mxu0 0.0
    %604 = vmatprep.subr.mxu0 0.0
    %605 = vmatpush2.msra.mxu0 0.0
    %606 = vmatprep.subr.mxu0 0.0
    %607 = vmatpush2.msra.mxu0 0.0
    %608 = vmatprep.subr.mxu0 0.0
    %609 = vmatpush2.msra.mxu0 0.0
    %610 = vmatprep.subr.mxu0 0.0
    %611 = vmatpush2.msra.mxu0 0.0
    %612 = vmatprep.subr.mxu0 0.0
    %613 = vmatpush2.msra.mxu0 0.0
    %614 = vmatprep.subr.mxu0 0.0
    %615 = vmatpush2.msra.mxu0 0.0
    %616 = vmatprep.subr.mxu0 0.0
    %617 = vmatpush2.msra.mxu0 0.0
    %618 = vmatprep.subr.mxu0 0.0
    %619 = vmatpush2.msra.mxu0 0.0
    %620 = vmatprep.subr.mxu0 0.0
    %621 = vmatpush2.msra.mxu0 0.0
    %622 = vmatprep.subr.mxu0 0.0
    %623 = vmatpush2.msra.mxu0 0.0
    %624 = vmatprep.subr.mxu0 0.0
    %625 = vmatpush2.msra.mxu0 0.0
    %626 = vmatprep.subr.mxu0 0.0
    %627 = vmatpush2.msra.mxu0 0.0
    %628 = vmatprep.subr.mxu0 0.0
    %629 = vmatpush2.msra.mxu0 0.0
    %630 = vmatprep.mubr.f32.mxu0 0.0
    %631 = vmatmul.mubr.f32.gmra.mxu0 %v561
    %v632 = vpop.f32.mrf.mxu0
    %v633 = vadd.f32 %v558, %v632
    %v634 = vpop.f32.mrf.mxu0
    %635 = vmatprep.mubr.f32.mxu0 0.0
    %636 = vmatmul.mubr.f32.gmra.mxu0 %v564
    %v637 = vpop.f32.mrf.mxu0
    %v638 = vadd.f32 %v558, %v637
    %v639 = vpop.f32.mrf.mxu0
    %640 = vdwg.mxu0
    %v641 = vmax.f32 %v633, 0.0
    %v642 = vmax.f32 %v638, 0.0
    %v643 = vld [vmem:[%s9] sm:$0xff]
    %v644 = vld [vmem:[%s9 + $0x8] sm:$0xff]
    %v645 = vld [vmem:[%s9 + $0x10] sm:$0xff]
    %v646 = vld [vmem:[%s9 + $0x18] sm:$0xff]
    %v647 = vld [vmem:[%s9 + $0x20] sm:$0xff]
    %v648 = vld [vmem:[%s9 + $0x28] sm:$0xff]
    %v649 = vld [vmem:[%s9 + $0x30] sm:$0xff]
    %v650 = vld [vmem:[%s9 + $0x38] sm:$0xff]
    %v651 = vld [vmem:[%s9 + $0x40] sm:$0xff]
    %v652 = vld [vmem:[%s9 + $0x48] sm:$0xff]
    %v653 = vld [vmem:[%s9 + $0x50] sm:$0xff]
    %v654 = vld [vmem:[%s9 + $0x58] sm:$0xff]
    %v655 = vld [vmem:[%s9 + $0x60] sm:$0xff]
    %v656 = vld [vmem:[%s9 + $0x68] sm:$0xff]
    %v657 = vld [vmem:[%s9 + $0x70] sm:$0xff]
    %v658 = vld [vmem:[%s9 + $0x78] sm:$0xff]
    %v659 = vld [vmem:[%s9 + $0x80] sm:$0xff]
    %v660 = vld [vmem:[%s9 + $0x88] sm:$0xff]
    %v661 = vld [vmem:[%s9 + $0x90] sm:$0xff]
    %v662 = vld [vmem:[%s9 + $0x98] sm:$0xff]
    %v663 = vld [vmem:[%s9 + $0xa0] sm:$0xff]
    %v664 = vld [vmem:[%s9 + $0xa8] sm:$0xff]
    %v665 = vld [vmem:[%s9 + $0xb0] sm:$0xff]
    %v666 = vld [vmem:[%s9 + $0xb8] sm:$0xff]
    %v667 = vld [vmem:[%s9 + $0xc0] sm:$0xff]
    %v668 = vld [vmem:[%s9 + $0xc8] sm:$0xff]
    %v669 = vld [vmem:[%s9 + $0xd0] sm:$0xff]
    %v670 = vld [vmem:[%s9 + $0xd8] sm:$0xff]
    %v671 = vld [vmem:[%s10] sm:$0x1]
    %v672 = vld [vmem:[%s11] sm:$0xff]
    %v673 = vld [vmem:[%s11 + $0x8] sm:$0xff]
    %v674 = vld [vmem:[%s11 + $0x10] sm:$0xff]
    %v675 = vld [vmem:[%s11 + $0x18] sm:$0xff]
    %v676 = vld [vmem:[%s11 + $0x20] sm:$0xff]
    %v677 = vld [vmem:[%s11 + $0x28] sm:$0xff]
    %v678 = vld [vmem:[%s11 + $0x30] sm:$0xff]
    %v679 = vld [vmem:[%s11 + $0x38] sm:$0xff]
    %v680 = vld [vmem:[%s11 + $0x40] sm:$0xff]
    %v681 = vld [vmem:[%s11 + $0x48] sm:$0xff]
    %v682 = vld [vmem:[%s11 + $0x50] sm:$0xff]
    %v683 = vld [vmem:[%s11 + $0x58] sm:$0xff]
    %v684 = vld [vmem:[%s12] sm:$0x1]
    %685 = vst.msk [vmem:[#allocation2] sm:$0xff] %vm394, %v641
    %686 = vst.msk [vmem:[#allocation2 + $0x10] sm:$0xff] %vm394, %v642
    %v689 = vrot.slane %v641, 7
    %v690 = vrot.slane %v642, 7
    %691 = vrot.lane.b32.xlu0 %v689, 32
    %v692 = vpop.permute.xlu0 %691
    %693 = vrot.lane.b32.xlu0 %v690, 32
    %v694 = vpop.permute.xlu0 %693
    %697 = vst.msk [vmem:[#allocation2] sm:$0xfe] %vm407, %v692
    %698 = vst.msk [vmem:[#allocation2 + $0x10] sm:$0xfe] %vm407, %v694
    %v699 = vrot.slane %v641, 6
    %v700 = vrot.slane %v642, 6
    %701 = vrot.lane.b32.xlu0 %v699, 64
    %v702 = vpop.permute.xlu0 %701
    %703 = vrot.lane.b32.xlu0 %v700, 64
    %v704 = vpop.permute.xlu0 %703
    %707 = vst.msk [vmem:[#allocation2] sm:$0xfc] %vm418, %v702
    %708 = vst.msk [vmem:[#allocation2 + $0x10] sm:$0xfc] %vm418, %v704
    %v709 = vrot.slane %v641, 5
    %v710 = vrot.slane %v642, 5
    %711 = vrot.lane.b32.xlu0 %v709, 96
    %v712 = vpop.permute.xlu0 %711
    %713 = vrot.lane.b32.xlu0 %v710, 96
    %v714 = vpop.permute.xlu0 %713
    %717 = vst.msk [vmem:[#allocation2] sm:$0xf8] %vm429, %v712
    %718 = vst.msk [vmem:[#allocation2 + $0x10] sm:$0xf8] %vm429, %v714
    %v719 = vrot.slane %v641, 4
    %v720 = vrot.slane %v642, 4
    %723 = vst.msk [vmem:[#allocation2 + $0x8] sm:$0xf0] %vm436, %v719
    %724 = vst.msk [vmem:[#allocation2 + $0x18] sm:$0xf0] %vm436, %v720
    %v725 = vrot.slane %v641, 3
    %v726 = vrot.slane %v642, 3
    %727 = vrot.lane.b32.xlu0 %v725, 32
    %v728 = vpop.permute.xlu0 %727
    %729 = vrot.lane.b32.xlu0 %v726, 32
    %v730 = vpop.permute.xlu0 %729
    %733 = vst.msk [vmem:[#allocation2 + $0x8] sm:$0xe0] %vm447, %v728
    %734 = vst.msk [vmem:[#allocation2 + $0x18] sm:$0xe0] %vm447, %v730
    %v735 = vrot.slane %v641, 2
    %v736 = vrot.slane %v642, 2
    %737 = vrot.lane.b32.xlu0 %v735, 64
    %v738 = vpop.permute.xlu0 %737
    %739 = vrot.lane.b32.xlu0 %v736, 64
    %v740 = vpop.permute.xlu0 %739
    %743 = vst.msk [vmem:[#allocation2 + $0x8] sm:$0xc0] %vm458, %v738
    %744 = vst.msk [vmem:[#allocation2 + $0x18] sm:$0xc0] %vm458, %v740
    %v745 = vld [vmem:[#allocation2] sm:$0xff]
    %v746 = vld [vmem:[#allocation2 + $0x8] sm:$0xff]
    %v747 = vld [vmem:[#allocation2 + $0x10] sm:$0xff]
    %v748 = vld [vmem:[#allocation2 + $0x18] sm:$0xff]
    %v750 = vlaneseq
    %v751 = vshrl.u32 %v750, 7
    %v752 = vsub.s32 0, %v751
    %v753 = vrot.slane %v671, %v752
    %v756 = vsel %vm55, %v746, 0
    %v759 = vsel %vm55, %v748, 0
    %761 = vmatprep.subr.mxu0 0.0
    %762 = vmatpush1.msra.mxu0 %v658
    %763 = vmatprep.subr.mxu0 0.0
    %764 = vmatpush1.msra.mxu0 %v657
    %765 = vmatprep.subr.mxu0 0.0
    %766 = vmatpush1.msra.mxu0 %v656
    %767 = vmatprep.subr.mxu0 0.0
    %768 = vmatpush1.msra.mxu0 %v655
    %769 = vmatprep.subr.mxu0 0.0
    %770 = vmatpush1.msra.mxu0 %v654
    %771 = vmatprep.subr.mxu0 0.0
    %772 = vmatpush1.msra.mxu0 %v653
    %773 = vmatprep.subr.mxu0 0.0
    %774 = vmatpush1.msra.mxu0 %v652
    %775 = vmatprep.subr.mxu0 0.0
    %776 = vmatpush1.msra.mxu0 %v651
    %777 = vmatprep.subr.mxu0 0.0
    %778 = vmatpush1.msra.mxu0 %v650
    %779 = vmatprep.subr.mxu0 0.0
    %780 = vmatpush1.msra.mxu0 %v649
    %781 = vmatprep.subr.mxu0 0.0
    %782 = vmatpush1.msra.mxu0 %v648
    %783 = vmatprep.subr.mxu0 0.0
    %784 = vmatpush1.msra.mxu0 %v647
    %785 = vmatprep.subr.mxu0 0.0
    %786 = vmatpush1.msra.mxu0 %v646
    %787 = vmatprep.subr.mxu0 0.0
    %788 = vmatpush1.msra.mxu0 %v645
    %789 = vmatprep.subr.mxu0 0.0
    %790 = vmatpush1.msra.mxu0 %v644
    %791 = vmatprep.subr.mxu0 0.0
    %792 = vmatpush1.msra.mxu0 %v643
    %793 = vmatprep.subr.mxu0 0.0
    %794 = vmatpush2.msra.mxu0 0.0
    %795 = vmatprep.subr.mxu0 0.0
    %796 = vmatpush2.msra.mxu0 0.0
    %797 = vmatprep.subr.mxu0 0.0
    %798 = vmatpush2.msra.mxu0 0.0
    %799 = vmatprep.subr.mxu0 0.0
    %800 = vmatpush2.msra.mxu0 0.0
    %801 = vmatprep.subr.mxu0 0.0
    %802 = vmatpush2.msra.mxu0 %v670
    %803 = vmatprep.subr.mxu0 0.0
    %804 = vmatpush2.msra.mxu0 %v669
    %805 = vmatprep.subr.mxu0 0.0
    %806 = vmatpush2.msra.mxu0 %v668
    %807 = vmatprep.subr.mxu0 0.0
    %808 = vmatpush2.msra.mxu0 %v667
    %809 = vmatprep.subr.mxu0 0.0
    %810 = vmatpush2.msra.mxu0 %v666
    %811 = vmatprep.subr.mxu0 0.0
    %812 = vmatpush2.msra.mxu0 %v665
    %813 = vmatprep.subr.mxu0 0.0
    %814 = vmatpush2.msra.mxu0 %v664
    %815 = vmatprep.subr.mxu0 0.0
    %816 = vmatpush2.msra.mxu0 %v663
    %817 = vmatprep.subr.mxu0 0.0
    %818 = vmatpush2.msra.mxu0 %v662
    %819 = vmatprep.subr.mxu0 0.0
    %820 = vmatpush2.msra.mxu0 %v661
    %821 = vmatprep.subr.mxu0 0.0
    %822 = vmatpush2.msra.mxu0 %v660
    %823 = vmatprep.subr.mxu0 0.0
    %824 = vmatpush2.msra.mxu0 %v659
    %825 = vmatprep.mubr.f32.mxu0 %v756
    %826 = vmatmul.mubr.f32.gmra.mxu0 %v745
    %v827 = vpop.f32.mrf.mxu0
    %v828 = vadd.f32 %v753, %v827
    %v829 = vpop.f32.mrf.mxu0
    %830 = vmatprep.mubr.f32.mxu0 %v759
    %831 = vmatmul.mubr.f32.gmra.mxu0 %v747
    %v832 = vpop.f32.mrf.mxu0
    %v833 = vadd.f32 %v753, %v832
    %v834 = vpop.f32.mrf.mxu0
    %835 = vdwg.mxu0
    %v836 = vmax.f32 %v828, 0.0
    %v837 = vmax.f32 %v833, 0.0
    %v839 = vlaneseq
    %v840 = vshrl.u32 %v839, 7
    %v841 = vsub.s32 0, %v840
    %v842 = vrot.slane %v684, %v841
    %v845 = vsel %vm55, %v836, 0
    %v848 = vsel %vm55, %v837, 0
    %850 = vmatprep.subr.mxu0 0.0
    %851 = vmatpush1.msra.mxu0 0.0
    %852 = vmatprep.subr.mxu0 0.0
    %853 = vmatpush1.msra.mxu0 0.0
    %854 = vmatprep.subr.mxu0 0.0
    %855 = vmatpush1.msra.mxu0 0.0
    %856 = vmatprep.subr.mxu0 0.0
    %857 = vmatpush1.msra.mxu0 0.0
    %858 = vmatprep.subr.mxu0 0.0
    %859 = vmatpush1.msra.mxu0 %v683
    %860 = vmatprep.subr.mxu0 0.0
    %861 = vmatpush1.msra.mxu0 %v682
    %862 = vmatprep.subr.mxu0 0.0
    %863 = vmatpush1.msra.mxu0 %v681
    %864 = vmatprep.subr.mxu0 0.0
    %865 = vmatpush1.msra.mxu0 %v680
    %866 = vmatprep.subr.mxu0 0.0
    %867 = vmatpush1.msra.mxu0 %v679
    %868 = vmatprep.subr.mxu0 0.0
    %869 = vmatpush1.msra.mxu0 %v678
    %870 = vmatprep.subr.mxu0 0.0
    %871 = vmatpush1.msra.mxu0 %v677
    %872 = vmatprep.subr.mxu0 0.0
    %873 = vmatpush1.msra.mxu0 %v676
    %874 = vmatprep.subr.mxu0 0.0
    %875 = vmatpush1.msra.mxu0 %v675
    %876 = vmatprep.subr.mxu0 0.0
    %877 = vmatpush1.msra.mxu0 %v674
    %878 = vmatprep.subr.mxu0 0.0
    %879 = vmatpush1.msra.mxu0 %v673
    %880 = vmatprep.subr.mxu0 0.0
    %881 = vmatpush1.msra.mxu0 %v672
    %882 = vmatprep.subr.mxu0 0.0
    %883 = vmatpush2.msra.mxu0 0.0
    %884 = vmatprep.subr.mxu0 0.0
    %885 = vmatpush2.msra.mxu0 0.0
    %886 = vmatprep.subr.mxu0 0.0
    %887 = vmatpush2.msra.mxu0 0.0
    %888 = vmatprep.subr.mxu0 0.0
    %889 = vmatpush2.msra.mxu0 0.0
    %890 = vmatprep.subr.mxu0 0.0
    %891 = vmatpush2.msra.mxu0 0.0
    %892 = vmatprep.subr.mxu0 0.0
    %893 = vmatpush2.msra.mxu0 0.0
    %894 = vmatprep.subr.mxu0 0.0
    %895 = vmatpush2.msra.mxu0 0.0
    %896 = vmatprep.subr.mxu0 0.0
    %897 = vmatpush2.msra.mxu0 0.0
    %898 = vmatprep.subr.mxu0 0.0
    %899 = vmatpush2.msra.mxu0 0.0
    %900 = vmatprep.subr.mxu0 0.0
    %901 = vmatpush2.msra.mxu0 0.0
    %902 = vmatprep.subr.mxu0 0.0
    %903 = vmatpush2.msra.mxu0 0.0
    %904 = vmatprep.subr.mxu0 0.0
    %905 = vmatpush2.msra.mxu0 0.0
    %906 = vmatprep.subr.mxu0 0.0
    %907 = vmatpush2.msra.mxu0 0.0
    %908 = vmatprep.subr.mxu0 0.0
    %909 = vmatpush2.msra.mxu0 0.0
    %910 = vmatprep.subr.mxu0 0.0
    %911 = vmatpush2.msra.mxu0 0.0
    %912 = vmatprep.subr.mxu0 0.0
    %913 = vmatpush2.msra.mxu0 0.0
    %914 = vmatprep.mubr.f32.mxu0 0.0
    %915 = vmatmul.mubr.f32.gmra.mxu0 %v845
    %v916 = vpop.f32.mrf.mxu0
    %v917 = vadd.f32 %v842, %v916
    %v918 = vpop.f32.mrf.mxu0
    %919 = vmatprep.mubr.f32.mxu0 0.0
    %920 = vmatmul.mubr.f32.gmra.mxu0 %v848
    %v921 = vpop.f32.mrf.mxu0
    %v922 = vadd.f32 %v842, %v921
    %v923 = vpop.f32.mrf.mxu0
    %924 = vdwg.mxu0
    %v925 = vmax.f32 %v917, 0.0
    %v926 = vmax.f32 %v922, 0.0
    %v927 = vld [vmem:[%s13] sm:$0xff]
    %v928 = vld [vmem:[%s13 + $0x8] sm:$0xff]
    %v929 = vld [vmem:[%s13 + $0x10] sm:$0xff]
    %v930 = vld [vmem:[%s13 + $0x18] sm:$0xff]
    %v931 = vld [vmem:[%s14] sm:$0xff]
    %v932 = vld [vmem:[%s14 + $0x8] sm:$0xff]
    %v933 = vld [vmem:[%s14 + $0x10] sm:$0xff]
    %v934 = vld [vmem:[%s14 + $0x18] sm:$0xff]
    %v935 = vld [vmem:[%s15] sm:$0x1]
    %v937 = vlaneseq
    %v938 = vshrl.u32 %v937, 7
    %v939 = vsub.s32 0, %v938
    %v940 = vrot.slane %v935, %v939
    %v943 = vsel %vm394, %v925, 0
    %v946 = vsel %vm394, %v926, 0
    %948 = vmatprep.subr.mxu0 0.0
    %949 = vmatpush1.msra.mxu0 0.0
    %950 = vmatprep.subr.mxu0 0.0
    %951 = vmatpush1.msra.mxu0 0.0
    %952 = vmatprep.subr.mxu0 0.0
    %953 = vmatpush1.msra.mxu0 0.0
    %954 = vmatprep.subr.mxu0 0.0
    %955 = vmatpush1.msra.mxu0 0.0
    %956 = vmatprep.subr.mxu0 0.0
    %957 = vmatpush1.msra.mxu0 0.0
    %958 = vmatprep.subr.mxu0 0.0
    %959 = vmatpush1.msra.mxu0 0.0
    %960 = vmatprep.subr.mxu0 0.0
    %961 = vmatpush1.msra.mxu0 0.0
    %962 = vmatprep.subr.mxu0 0.0
    %963 = vmatpush1.msra.mxu0 0.0
    %964 = vmatprep.subr.mxu0 0.0
    %965 = vmatpush1.msra.mxu0 0.0
    %966 = vmatprep.subr.mxu0 0.0
    %967 = vmatpush1.msra.mxu0 0.0
    %968 = vmatprep.subr.mxu0 0.0
    %969 = vmatpush1.msra.mxu0 0.0
    %970 = vmatprep.subr.mxu0 0.0
    %971 = vmatpush1.msra.mxu0 0.0
    %972 = vmatprep.subr.mxu0 0.0
    %973 = vmatpush1.msra.mxu0 %v930
    %974 = vmatprep.subr.mxu0 0.0
    %975 = vmatpush1.msra.mxu0 %v929
    %976 = vmatprep.subr.mxu0 0.0
    %977 = vmatpush1.msra.mxu0 %v928
    %978 = vmatprep.subr.mxu0 0.0
    %979 = vmatpush1.msra.mxu0 %v927
    %980 = vmatprep.subr.mxu0 0.0
    %981 = vmatpush2.msra.mxu0 0.0
    %982 = vmatprep.subr.mxu0 0.0
    %983 = vmatpush2.msra.mxu0 0.0
    %984 = vmatprep.subr.mxu0 0.0
    %985 = vmatpush2.msra.mxu0 0.0
    %986 = vmatprep.subr.mxu0 0.0
    %987 = vmatpush2.msra.mxu0 0.0
    %988 = vmatprep.subr.mxu0 0.0
    %989 = vmatpush2.msra.mxu0 0.0
    %990 = vmatprep.subr.mxu0 0.0
    %991 = vmatpush2.msra.mxu0 0.0
    %992 = vmatprep.subr.mxu0 0.0
    %993 = vmatpush2.msra.mxu0 0.0
    %994 = vmatprep.subr.mxu0 0.0
    %995 = vmatpush2.msra.mxu0 0.0
    %996 = vmatprep.subr.mxu0 0.0
    %997 = vmatpush2.msra.mxu0 0.0
    %998 = vmatprep.subr.mxu0 0.0
    %999 = vmatpush2.msra.mxu0 0.0
    %1000 = vmatprep.subr.mxu0 0.0
    %1001 = vmatpush2.msra.mxu0 0.0
    %1002 = vmatprep.subr.mxu0 0.0
    %1003 = vmatpush2.msra.mxu0 0.0
    %1004 = vmatprep.subr.mxu0 0.0
    %1005 = vmatpush2.msra.mxu0 0.0
    %1006 = vmatprep.subr.mxu0 0.0
    %1007 = vmatpush2.msra.mxu0 0.0
    %1008 = vmatprep.subr.mxu0 0.0
    %1009 = vmatpush2.msra.mxu0 0.0
    %1010 = vmatprep.subr.mxu0 0.0
    %1011 = vmatpush2.msra.mxu0 0.0
    %1012 = vmatprep.mubr.f32.mxu0 0.0
    %1013 = vmatmul.mubr.f32.gmra.mxu0 %v943
    %v1014 = vpop.f32.mrf.mxu0
    %v1015 = vadd.f32 %v940, %v1014
    %v1016 = vpop.f32.mrf.mxu0
    %1017 = vmatprep.mubr.f32.mxu0 0.0
    %1018 = vmatmul.mubr.f32.gmra.mxu0 %v946
    %v1019 = vpop.f32.mrf.mxu0
    %v1020 = vadd.f32 %v940, %v1019
    %v1021 = vpop.f32.mrf.mxu0
    %1022 = vdwg.mxu0
    %v1024 = vsel %vm394, 0.0, 0
    %1026 = vmatprep.subr.mxu0 0.0
    %1027 = vmatpush1.msra.mxu0 0.0
    %1028 = vmatprep.subr.mxu0 0.0
    %1029 = vmatpush1.msra.mxu0 0.0
    %1030 = vmatprep.subr.mxu0 0.0
    %1031 = vmatpush1.msra.mxu0 0.0
    %1032 = vmatprep.subr.mxu0 0.0
    %1033 = vmatpush1.msra.mxu0 0.0
    %1034 = vmatprep.subr.mxu0 0.0
    %1035 = vmatpush1.msra.mxu0 0.0
    %1036 = vmatprep.subr.mxu0 0.0
    %1037 = vmatpush1.msra.mxu0 0.0
    %1038 = vmatprep.subr.mxu0 0.0
    %1039 = vmatpush1.msra.mxu0 0.0
    %1040 = vmatprep.subr.mxu0 0.0
    %1041 = vmatpush1.msra.mxu0 0.0
    %1042 = vmatprep.subr.mxu0 0.0
    %1043 = vmatpush1.msra.mxu0 0.0
    %1044 = vmatprep.subr.mxu0 0.0
    %1045 = vmatpush1.msra.mxu0 0.0
    %1046 = vmatprep.subr.mxu0 0.0
    %1047 = vmatpush1.msra.mxu0 0.0
    %1048 = vmatprep.subr.mxu0 0.0
    %1049 = vmatpush1.msra.mxu0 0.0
    %1050 = vmatprep.subr.mxu0 0.0
    %1051 = vmatpush1.msra.mxu0 %v934
    %1052 = vmatprep.subr.mxu0 0.0
    %1053 = vmatpush1.msra.mxu0 %v933
    %1054 = vmatprep.subr.mxu0 0.0
    %1055 = vmatpush1.msra.mxu0 %v932
    %1056 = vmatprep.subr.mxu0 0.0
    %1057 = vmatpush1.msra.mxu0 %v931
    %1058 = vmatprep.subr.mxu0 0.0
    %1059 = vmatpush2.msra.mxu0 0.0
    %1060 = vmatprep.subr.mxu0 0.0
    %1061 = vmatpush2.msra.mxu0 0.0
    %1062 = vmatprep.subr.mxu0 0.0
    %1063 = vmatpush2.msra.mxu0 0.0
    %1064 = vmatprep.subr.mxu0 0.0
    %1065 = vmatpush2.msra.mxu0 0.0
    %1066 = vmatprep.subr.mxu0 0.0
    %1067 = vmatpush2.msra.mxu0 0.0
    %1068 = vmatprep.subr.mxu0 0.0
    %1069 = vmatpush2.msra.mxu0 0.0
    %1070 = vmatprep.subr.mxu0 0.0
    %1071 = vmatpush2.msra.mxu0 0.0
    %1072 = vmatprep.subr.mxu0 0.0
    %1073 = vmatpush2.msra.mxu0 0.0
    %1074 = vmatprep.subr.mxu0 0.0
    %1075 = vmatpush2.msra.mxu0 0.0
    %1076 = vmatprep.subr.mxu0 0.0
    %1077 = vmatpush2.msra.mxu0 0.0
    %1078 = vmatprep.subr.mxu0 0.0
    %1079 = vmatpush2.msra.mxu0 0.0
    %1080 = vmatprep.subr.mxu0 0.0
    %1081 = vmatpush2.msra.mxu0 0.0
    %1082 = vmatprep.subr.mxu0 0.0
    %1083 = vmatpush2.msra.mxu0 0.0
    %1084 = vmatprep.subr.mxu0 0.0
    %1085 = vmatpush2.msra.mxu0 0.0
    %1086 = vmatprep.subr.mxu0 0.0
    %1087 = vmatpush2.msra.mxu0 0.0
    %1088 = vmatprep.subr.mxu0 0.0
    %1089 = vmatpush2.msra.mxu0 0.0
    %1090 = vmatprep.mubr.f32.mxu0 0.0
    %1091 = vmatmul.mubr.f32.gmra.mxu0 %v1024
    %v1092 = vpop.f32.mrf.mxu0
    %v1093 = vadd.f32 0.0, %v1092
    %v1094 = vpop.f32.mrf.mxu0
    %1095 = vdwg.mxu0
    %v1097 = vrot.slane %v1093, 1
    %v1100 = vadd.f32 %v1015, %v1093
    %v1101 = vadd.f32 %v1020, %v1097
    %v1102 = vxor.u32 %v1100, 2147483648
    %v1103 = vxor.u32 %v1101, 2147483648
    %v1104 = vmul.f32 %v1102, 1.442695
    %v1105 = vpow.pop %v1104
    %v1106 = vmul.f32 %v1103, 1.442695
    %v1107 = vpow.pop %v1106
    %v1108 = vadd.f32 %v1105, 1.0
    %v1109 = vadd.f32 %v1107, 1.0
    %v1110 = vrcp.pop %v1108
    %v1111 = vmul.f32 1.0, %v1110
    %v1112 = vrcp.pop %v1109
    %v1113 = vmul.f32 1.0, %v1112
    %v1114 = vtanh.pop %v1100
    %v1115 = vtanh.pop %v1101
    %v1116 = vmul.f32 %v1111, 0.0
    %v1117 = vmul.f32 %v1113, 0.0
    %1120 = vrot.lane.b32.xlu0 %v1114, 32
    %v1121 = vpop.permute.xlu0 %1120
    %1122 = vrot.lane.b32.xlu0 %v1115, 32
    %v1123 = vpop.permute.xlu0 %1122
    %v1126 = vmul.f32 %v1111, %v1121
    %v1127 = vmul.f32 %v1113, %v1123
    %1130 = vrot.lane.b32.xlu0 %v1126, 32
    %v1131 = vpop.permute.xlu0 %1130
    %1132 = vrot.lane.b32.xlu0 %v1127, 32
    %v1133 = vpop.permute.xlu0 %1132
    %v1136 = vadd.f32 %v1116, %v1131
    %v1137 = vadd.f32 %v1117, %v1133
    %v1138 = vtanh.pop %v1136
    %v1139 = vtanh.pop %v1137
    %1142 = vrot.lane.b32.xlu0 %v1138, 32
    %v1143 = vpop.permute.xlu0 %1142
    %1144 = vrot.lane.b32.xlu0 %v1139, 32
    %v1145 = vpop.permute.xlu0 %1144
    %v1148 = vmul.f32 %v1111, %v1143
    %v1149 = vmul.f32 %v1113, %v1145
    %v1152 = vrot.slane %v1149, 7
    %vm1153 = vcmask 1041409
    %v1154 = vsel %vm1153, %v1152, %v1148
    %1155 = vrot.lane.b32.xlu0 %v1154, 64
    %v1156 = vpop.permute.xlu0 %1155
    %v1157 = vsel %vm394, %v1156, 0
    %1159 = vmatprep.subr.mxu0 0.0
    %1160 = vmatpush1.msra.mxu0 0.0
    %1161 = vmatprep.subr.mxu0 0.0
    %1162 = vmatpush1.msra.mxu0 0.0
    %1163 = vmatprep.subr.mxu0 0.0
    %1164 = vmatpush1.msra.mxu0 0.0
    %1165 = vmatprep.subr.mxu0 0.0
    %1166 = vmatpush1.msra.mxu0 0.0
    %1167 = vmatprep.subr.mxu0 0.0
    %1168 = vmatpush1.msra.mxu0 0.0
    %1169 = vmatprep.subr.mxu0 0.0
    %1170 = vmatpush1.msra.mxu0 0.0
    %1171 = vmatprep.subr.mxu0 0.0
    %1172 = vmatpush1.msra.mxu0 0.0
    %1173 = vmatprep.subr.mxu0 0.0
    %1174 = vmatpush1.msra.mxu0 0.0
    %1175 = vmatprep.subr.mxu0 0.0
    %1176 = vmatpush1.msra.mxu0 0.0
    %1177 = vmatprep.subr.mxu0 0.0
    %1178 = vmatpush1.msra.mxu0 0.0
    %1179 = vmatprep.subr.mxu0 0.0
    %1180 = vmatpush1.msra.mxu0 0.0
    %1181 = vmatprep.subr.mxu0 0.0
    %1182 = vmatpush1.msra.mxu0 0.0
    %1183 = vmatprep.subr.mxu0 0.0
    %1184 = vmatpush1.msra.mxu0 %v934
    %1185 = vmatprep.subr.mxu0 0.0
    %1186 = vmatpush1.msra.mxu0 %v933
    %1187 = vmatprep.subr.mxu0 0.0
    %1188 = vmatpush1.msra.mxu0 %v932
    %1189 = vmatprep.subr.mxu0 0.0
    %1190 = vmatpush1.msra.mxu0 %v931
    %1191 = vmatprep.subr.mxu0 0.0
    %1192 = vmatpush2.msra.mxu0 0.0
    %1193 = vmatprep.subr.mxu0 0.0
    %1194 = vmatpush2.msra.mxu0 0.0
    %1195 = vmatprep.subr.mxu0 0.0
    %1196 = vmatpush2.msra.mxu0 0.0
    %1197 = vmatprep.subr.mxu0 0.0
    %1198 = vmatpush2.msra.mxu0 0.0
    %1199 = vmatprep.subr.mxu0 0.0
    %1200 = vmatpush2.msra.mxu0 0.0
    %1201 = vmatprep.subr.mxu0 0.0
    %1202 = vmatpush2.msra.mxu0 0.0
    %1203 = vmatprep.subr.mxu0 0.0
    %1204 = vmatpush2.msra.mxu0 0.0
    %1205 = vmatprep.subr.mxu0 0.0
    %1206 = vmatpush2.msra.mxu0 0.0
    %1207 = vmatprep.subr.mxu0 0.0
    %1208 = vmatpush2.msra.mxu0 0.0
    %1209 = vmatprep.subr.mxu0 0.0
    %1210 = vmatpush2.msra.mxu0 0.0
    %1211 = vmatprep.subr.mxu0 0.0
    %1212 = vmatpush2.msra.mxu0 0.0
    %1213 = vmatprep.subr.mxu0 0.0
    %1214 = vmatpush2.msra.mxu0 0.0
    %1215 = vmatprep.subr.mxu0 0.0
    %1216 = vmatpush2.msra.mxu0 0.0
    %1217 = vmatprep.subr.mxu0 0.0
    %1218 = vmatpush2.msra.mxu0 0.0
    %1219 = vmatprep.subr.mxu0 0.0
    %1220 = vmatpush2.msra.mxu0 0.0
    %1221 = vmatprep.subr.mxu0 0.0
    %1222 = vmatpush2.msra.mxu0 0.0
    %1223 = vmatprep.mubr.f32.mxu0 0.0
    %1224 = vmatmul.mubr.f32.gmra.mxu0 %v1157
    %v1225 = vpop.f32.mrf.mxu0
    %v1226 = vadd.f32 0.0, %v1225
    %v1227 = vpop.f32.mrf.mxu0
    %1228 = vdwg.mxu0
    %v1230 = vrot.slane %v1226, 7
    %v1233 = vadd.f32 %v1015, %v1230
    %v1234 = vadd.f32 %v1020, %v1226
    %v1235 = vxor.u32 %v1233, 2147483648
    %v1236 = vxor.u32 %v1234, 2147483648
    %v1237 = vmul.f32 %v1235, 1.442695
    %v1238 = vpow.pop %v1237
    %v1239 = vmul.f32 %v1236, 1.442695
    %v1240 = vpow.pop %v1239
    %v1241 = vadd.f32 %v1238, 1.0
    %v1242 = vadd.f32 %v1240, 1.0
    %v1243 = vrcp.pop %v1241
    %v1244 = vmul.f32 1.0, %v1243
    %v1245 = vrcp.pop %v1242
    %v1246 = vmul.f32 1.0, %v1245
    %v1247 = vtanh.pop %v1233
    %v1248 = vtanh.pop %v1234
    %v1251 = vrot.slane %v1136, 7
    %v1252 = vrot.slane %v1137, 7
    %v1255 = vmul.f32 %v1244, %v1251
    %v1256 = vmul.f32 %v1246, %v1252
    %1259 = vrot.lane.b32.xlu0 %v1247, 32
    %v1260 = vpop.permute.xlu0 %1259
    %1261 = vrot.lane.b32.xlu0 %v1248, 32
    %v1262 = vpop.permute.xlu0 %1261
    %v1265 = vmul.f32 %v1244, %v1260
    %v1266 = vmul.f32 %v1246, %v1262
    %1269 = vrot.lane.b32.xlu0 %v1265, 32
    %v1270 = vpop.permute.xlu0 %1269
    %1271 = vrot.lane.b32.xlu0 %v1266, 32
    %v1272 = vpop.permute.xlu0 %1271
    %v1275 = vadd.f32 %v1255, %v1270
    %v1276 = vadd.f32 %v1256, %v1272
    %v1277 = vtanh.pop %v1275
    %v1278 = vtanh.pop %v1276
    %1281 = vrot.lane.b32.xlu0 %v1277, 32
    %v1282 = vpop.permute.xlu0 %1281
    %1283 = vrot.lane.b32.xlu0 %v1278, 32
    %v1284 = vpop.permute.xlu0 %1283
    %v1287 = vmul.f32 %v1244, %v1282
    %v1288 = vmul.f32 %v1246, %v1284
    %v1291 = vrot.slane %v1287, 1
    %v1292 = vsel %vm1153, %v1288, %v1291
    %1293 = vrot.lane.b32.xlu0 %v1292, 64
    %v1294 = vpop.permute.xlu0 %1293
    %v1295 = vsel %vm394, %v1294, 0
    %1297 = vmatprep.subr.mxu0 0.0
    %1298 = vmatpush1.msra.mxu0 0.0
    %1299 = vmatprep.subr.mxu0 0.0
    %1300 = vmatpush1.msra.mxu0 0.0
    %1301 = vmatprep.subr.mxu0 0.0
    %1302 = vmatpush1.msra.mxu0 0.0
    %1303 = vmatprep.subr.mxu0 0.0
    %1304 = vmatpush1.msra.mxu0 0.0
    %1305 = vmatprep.subr.mxu0 0.0
    %1306 = vmatpush1.msra.mxu0 0.0
    %1307 = vmatprep.subr.mxu0 0.0
    %1308 = vmatpush1.msra.mxu0 0.0
    %1309 = vmatprep.subr.mxu0 0.0
    %1310 = vmatpush1.msra.mxu0 0.0
    %1311 = vmatprep.subr.mxu0 0.0
    %1312 = vmatpush1.msra.mxu0 0.0
    %1313 = vmatprep.subr.mxu0 0.0
    %1314 = vmatpush1.msra.mxu0 0.0
    %1315 = vmatprep.subr.mxu0 0.0
    %1316 = vmatpush1.msra.mxu0 0.0
    %1317 = vmatprep.subr.mxu0 0.0
    %1318 = vmatpush1.msra.mxu0 0.0
    %1319 = vmatprep.subr.mxu0 0.0
    %1320 = vmatpush1.msra.mxu0 0.0
    %1321 = vmatprep.subr.mxu0 0.0
    %1322 = vmatpush1.msra.mxu0 %v934
    %1323 = vmatprep.subr.mxu0 0.0
    %1324 = vmatpush1.msra.mxu0 %v933
    %1325 = vmatprep.subr.mxu0 0.0
    %1326 = vmatpush1.msra.mxu0 %v932
    %1327 = vmatprep.subr.mxu0 0.0
    %1328 = vmatpush1.msra.mxu0 %v931
    %1329 = vmatprep.subr.mxu0 0.0
    %1330 = vmatpush2.msra.mxu0 0.0
    %1331 = vmatprep.subr.mxu0 0.0
    %1332 = vmatpush2.msra.mxu0 0.0
    %1333 = vmatprep.subr.mxu0 0.0
    %1334 = vmatpush2.msra.mxu0 0.0
    %1335 = vmatprep.subr.mxu0 0.0
    %1336 = vmatpush2.msra.mxu0 0.0
    %1337 = vmatprep.subr.mxu0 0.0
    %1338 = vmatpush2.msra.mxu0 0.0
    %1339 = vmatprep.subr.mxu0 0.0
    %1340 = vmatpush2.msra.mxu0 0.0
    %1341 = vmatprep.subr.mxu0 0.0
    %1342 = vmatpush2.msra.mxu0 0.0
    %1343 = vmatprep.subr.mxu0 0.0
    %1344 = vmatpush2.msra.mxu0 0.0
    %1345 = vmatprep.subr.mxu0 0.0
    %1346 = vmatpush2.msra.mxu0 0.0
    %1347 = vmatprep.subr.mxu0 0.0
    %1348 = vmatpush2.msra.mxu0 0.0
    %1349 = vmatprep.subr.mxu0 0.0
    %1350 = vmatpush2.msra.mxu0 0.0
    %1351 = vmatprep.subr.mxu0 0.0
    %1352 = vmatpush2.msra.mxu0 0.0
    %1353 = vmatprep.subr.mxu0 0.0
    %1354 = vmatpush2.msra.mxu0 0.0
    %1355 = vmatprep.subr.mxu0 0.0
    %1356 = vmatpush2.msra.mxu0 0.0
    %1357 = vmatprep.subr.mxu0 0.0
    %1358 = vmatpush2.msra.mxu0 0.0
    %1359 = vmatprep.subr.mxu0 0.0
    %1360 = vmatpush2.msra.mxu0 0.0
    %1361 = vmatprep.mubr.f32.mxu0 0.0
    %1362 = vmatmul.mubr.f32.gmra.mxu0 %v1295
    %v1363 = vpop.f32.mrf.mxu0
    %v1364 = vadd.f32 0.0, %v1363
    %v1365 = vpop.f32.mrf.mxu0
    %1366 = vdwg.mxu0
    %v1368 = vrot.slane %v1364, 6
    %v1369 = vrot.slane %v1364, 7
    %v1372 = vadd.f32 %v1015, %v1368
    %v1373 = vadd.f32 %v1020, %v1369
    %v1374 = vxor.u32 %v1372, 2147483648
    %v1375 = vxor.u32 %v1373, 2147483648
    %v1376 = vmul.f32 %v1374, 1.442695
    %v1377 = vpow.pop %v1376
    %v1378 = vmul.f32 %v1375, 1.442695
    %v1379 = vpow.pop %v1378
    %v1380 = vadd.f32 %v1377, 1.0
    %v1381 = vadd.f32 %v1379, 1.0
    %v1382 = vrcp.pop %v1380
    %v1383 = vmul.f32 1.0, %v1382
    %v1384 = vrcp.pop %v1381
    %v1385 = vmul.f32 1.0, %v1384
    %v1386 = vtanh.pop %v1372
    %v1387 = vtanh.pop %v1373
    %v1390 = vrot.slane %v1275, 7
    %v1391 = vrot.slane %v1276, 7
    %v1394 = vmul.f32 %v1383, %v1390
    %v1395 = vmul.f32 %v1385, %v1391
    %1398 = vrot.lane.b32.xlu0 %v1386, 32
    %v1399 = vpop.permute.xlu0 %1398
    %1400 = vrot.lane.b32.xlu0 %v1387, 32
    %v1401 = vpop.permute.xlu0 %1400
    %v1404 = vmul.f32 %v1383, %v1399
    %v1405 = vmul.f32 %v1385, %v1401
    %1408 = vrot.lane.b32.xlu0 %v1404, 32
    %v1409 = vpop.permute.xlu0 %1408
    %1410 = vrot.lane.b32.xlu0 %v1405, 32
    %v1411 = vpop.permute.xlu0 %1410
    %v1414 = vadd.f32 %v1394, %v1409
    %v1415 = vadd.f32 %v1395, %v1411
    %v1416 = vtanh.pop %v1414
    %v1417 = vtanh.pop %v1415
    %1420 = vrot.lane.b32.xlu0 %v1416, 32
    %v1421 = vpop.permute.xlu0 %1420
    %1422 = vrot.lane.b32.xlu0 %v1417, 32
    %v1423 = vpop.permute.xlu0 %1422
    %v1426 = vmul.f32 %v1383, %v1421
    %v1427 = vmul.f32 %v1385, %v1423
    %v1430 = vrot.slane %v1426, 2
    %v1431 = vrot.slane %v1427, 1
    %v1432 = vsel %vm1153, %v1431, %v1430
    %1433 = vrot.lane.b32.xlu0 %v1432, 64
    %v1434 = vpop.permute.xlu0 %1433
    %v1435 = vsel %vm394, %v1434, 0
    %1437 = vmatprep.subr.mxu0 0.0
    %1438 = vmatpush1.msra.mxu0 0.0
    %1439 = vmatprep.subr.mxu0 0.0
    %1440 = vmatpush1.msra.mxu0 0.0
    %1441 = vmatprep.subr.mxu0 0.0
    %1442 = vmatpush1.msra.mxu0 0.0
    %1443 = vmatprep.subr.mxu0 0.0
    %1444 = vmatpush1.msra.mxu0 0.0
    %1445 = vmatprep.subr.mxu0 0.0
    %1446 = vmatpush1.msra.mxu0 0.0
    %1447 = vmatprep.subr.mxu0 0.0
    %1448 = vmatpush1.msra.mxu0 0.0
    %1449 = vmatprep.subr.mxu0 0.0
    %1450 = vmatpush1.msra.mxu0 0.0
    %1451 = vmatprep.subr.mxu0 0.0
    %1452 = vmatpush1.msra.mxu0 0.0
    %1453 = vmatprep.subr.mxu0 0.0
    %1454 = vmatpush1.msra.mxu0 0.0
    %1455 = vmatprep.subr.mxu0 0.0
    %1456 = vmatpush1.msra.mxu0 0.0
    %1457 = vmatprep.subr.mxu0 0.0
    %1458 = vmatpush1.msra.mxu0 0.0
    %1459 = vmatprep.subr.mxu0 0.0
    %1460 = vmatpush1.msra.mxu0 0.0
    %1461 = vmatprep.subr.mxu0 0.0
    %1462 = vmatpush1.msra.mxu0 %v934
    %1463 = vmatprep.subr.mxu0 0.0
    %1464 = vmatpush1.msra.mxu0 %v933
    %1465 = vmatprep.subr.mxu0 0.0
    %1466 = vmatpush1.msra.mxu0 %v932
    %1467 = vmatprep.subr.mxu0 0.0
    %1468 = vmatpush1.msra.mxu0 %v931
    %1469 = vmatprep.subr.mxu0 0.0
    %1470 = vmatpush2.msra.mxu0 0.0
    %1471 = vmatprep.subr.mxu0 0.0
    %1472 = vmatpush2.msra.mxu0 0.0
    %1473 = vmatprep.subr.mxu0 0.0
    %1474 = vmatpush2.msra.mxu0 0.0
    %1475 = vmatprep.subr.mxu0 0.0
    %1476 = vmatpush2.msra.mxu0 0.0
    %1477 = vmatprep.subr.mxu0 0.0
    %1478 = vmatpush2.msra.mxu0 0.0
    %1479 = vmatprep.subr.mxu0 0.0
    %1480 = vmatpush2.msra.mxu0 0.0
    %1481 = vmatprep.subr.mxu0 0.0
    %1482 = vmatpush2.msra.mxu0 0.0
    %1483 = vmatprep.subr.mxu0 0.0
    %1484 = vmatpush2.msra.mxu0 0.0
    %1485 = vmatprep.subr.mxu0 0.0
    %1486 = vmatpush2.msra.mxu0 0.0
    %1487 = vmatprep.subr.mxu0 0.0
    %1488 = vmatpush2.msra.mxu0 0.0
    %1489 = vmatprep.subr.mxu0 0.0
    %1490 = vmatpush2.msra.mxu0 0.0
    %1491 = vmatprep.subr.mxu0 0.0
    %1492 = vmatpush2.msra.mxu0 0.0
    %1493 = vmatprep.subr.mxu0 0.0
    %1494 = vmatpush2.msra.mxu0 0.0
    %1495 = vmatprep.subr.mxu0 0.0
    %1496 = vmatpush2.msra.mxu0 0.0
    %1497 = vmatprep.subr.mxu0 0.0
    %1498 = vmatpush2.msra.mxu0 0.0
    %1499 = vmatprep.subr.mxu0 0.0
    %1500 = vmatpush2.msra.mxu0 0.0
    %1501 = vmatprep.mubr.f32.mxu0 0.0
    %1502 = vmatmul.mubr.f32.gmra.mxu0 %v1435
    %v1503 = vpop.f32.mrf.mxu0
    %v1504 = vadd.f32 0.0, %v1503
    %v1505 = vpop.f32.mrf.mxu0
    %1506 = vdwg.mxu0
    %v1508 = vrot.slane %v1504, 5
    %v1509 = vrot.slane %v1504, 6
    %v1512 = vadd.f32 %v1015, %v1508
    %v1513 = vadd.f32 %v1020, %v1509
    %v1514 = vxor.u32 %v1512, 2147483648
    %v1515 = vxor.u32 %v1513, 2147483648
    %v1516 = vmul.f32 %v1514, 1.442695
    %v1517 = vpow.pop %v1516
    %v1518 = vmul.f32 %v1515, 1.442695
    %v1519 = vpow.pop %v1518
    %v1520 = vadd.f32 %v1517, 1.0
    %v1521 = vadd.f32 %v1519, 1.0
    %v1522 = vrcp.pop %v1520
    %v1523 = vmul.f32 1.0, %v1522
    %v1524 = vrcp.pop %v1521
    %v1525 = vmul.f32 1.0, %v1524
    %v1526 = vtanh.pop %v1512
    %v1527 = vtanh.pop %v1513
    %v1530 = vrot.slane %v1414, 7
    %v1531 = vrot.slane %v1415, 7
    %v1534 = vmul.f32 %v1523, %v1530
    %v1535 = vmul.f32 %v1525, %v1531
    %1538 = vrot.lane.b32.xlu0 %v1526, 32
    %v1539 = vpop.permute.xlu0 %1538
    %1540 = vrot.lane.b32.xlu0 %v1527, 32
    %v1541 = vpop.permute.xlu0 %1540
    %v1544 = vmul.f32 %v1523, %v1539
    %v1545 = vmul.f32 %v1525, %v1541
    %1548 = vrot.lane.b32.xlu0 %v1544, 32
    %v1549 = vpop.permute.xlu0 %1548
    %1550 = vrot.lane.b32.xlu0 %v1545, 32
    %v1551 = vpop.permute.xlu0 %1550
    %v1554 = vadd.f32 %v1534, %v1549
    %v1555 = vadd.f32 %v1535, %v1551
    %v1556 = vtanh.pop %v1554
    %v1557 = vtanh.pop %v1555
    %1560 = vrot.lane.b32.xlu0 %v1556, 32
    %v1561 = vpop.permute.xlu0 %1560
    %1562 = vrot.lane.b32.xlu0 %v1557, 32
    %v1563 = vpop.permute.xlu0 %1562
    %v1566 = vmul.f32 %v1523, %v1561
    %v1567 = vmul.f32 %v1525, %v1563
    %v1570 = vrot.slane %v1566, 3
    %v1571 = vrot.slane %v1567, 2
    %v1572 = vsel %vm1153, %v1571, %v1570
    %1573 = vrot.lane.b32.xlu0 %v1572, 64
    %v1574 = vpop.permute.xlu0 %1573
    %v1575 = vsel %vm394, %v1574, 0
    %1577 = vmatprep.subr.mxu0 0.0
    %1578 = vmatpush1.msra.mxu0 0.0
    %1579 = vmatprep.subr.mxu0 0.0
    %1580 = vmatpush1.msra.mxu0 0.0
    %1581 = vmatprep.subr.mxu0 0.0
    %1582 = vmatpush1.msra.mxu0 0.0
    %1583 = vmatprep.subr.mxu0 0.0
    %1584 = vmatpush1.msra.mxu0 0.0
    %1585 = vmatprep.subr.mxu0 0.0
    %1586 = vmatpush1.msra.mxu0 0.0
    %1587 = vmatprep.subr.mxu0 0.0
    %1588 = vmatpush1.msra.mxu0 0.0
    %1589 = vmatprep.subr.mxu0 0.0
    %1590 = vmatpush1.msra.mxu0 0.0
    %1591 = vmatprep.subr.mxu0 0.0
    %1592 = vmatpush1.msra.mxu0 0.0
    %1593 = vmatprep.subr.mxu0 0.0
    %1594 = vmatpush1.msra.mxu0 0.0
    %1595 = vmatprep.subr.mxu0 0.0
    %1596 = vmatpush1.msra.mxu0 0.0
    %1597 = vmatprep.subr.mxu0 0.0
    %1598 = vmatpush1.msra.mxu0 0.0
    %1599 = vmatprep.subr.mxu0 0.0
    %1600 = vmatpush1.msra.mxu0 0.0
    %1601 = vmatprep.subr.mxu0 0.0
    %1602 = vmatpush1.msra.mxu0 %v934
    %1603 = vmatprep.subr.mxu0 0.0
    %1604 = vmatpush1.msra.mxu0 %v933
    %1605 = vmatprep.subr.mxu0 0.0
    %1606 = vmatpush1.msra.mxu0 %v932
    %1607 = vmatprep.subr.mxu0 0.0
    %1608 = vmatpush1.msra.mxu0 %v931
    %1609 = vmatprep.subr.mxu0 0.0
    %1610 = vmatpush2.msra.mxu0 0.0
    %1611 = vmatprep.subr.mxu0 0.0
    %1612 = vmatpush2.msra.mxu0 0.0
    %1613 = vmatprep.subr.mxu0 0.0
    %1614 = vmatpush2.msra.mxu0 0.0
    %1615 = vmatprep.subr.mxu0 0.0
    %1616 = vmatpush2.msra.mxu0 0.0
    %1617 = vmatprep.subr.mxu0 0.0
    %1618 = vmatpush2.msra.mxu0 0.0
    %1619 = vmatprep.subr.mxu0 0.0
    %1620 = vmatpush2.msra.mxu0 0.0
    %1621 = vmatprep.subr.mxu0 0.0
    %1622 = vmatpush2.msra.mxu0 0.0
    %1623 = vmatprep.subr.mxu0 0.0
    %1624 = vmatpush2.msra.mxu0 0.0
    %1625 = vmatprep.subr.mxu0 0.0
    %1626 = vmatpush2.msra.mxu0 0.0
    %1627 = vmatprep.subr.mxu0 0.0
    %1628 = vmatpush2.msra.mxu0 0.0
    %1629 = vmatprep.subr.mxu0 0.0
    %1630 = vmatpush2.msra.mxu0 0.0
    %1631 = vmatprep.subr.mxu0 0.0
    %1632 = vmatpush2.msra.mxu0 0.0
    %1633 = vmatprep.subr.mxu0 0.0
    %1634 = vmatpush2.msra.mxu0 0.0
    %1635 = vmatprep.subr.mxu0 0.0
    %1636 = vmatpush2.msra.mxu0 0.0
    %1637 = vmatprep.subr.mxu0 0.0
    %1638 = vmatpush2.msra.mxu0 0.0
    %1639 = vmatprep.subr.mxu0 0.0
    %1640 = vmatpush2.msra.mxu0 0.0
    %1641 = vmatprep.mubr.f32.mxu0 0.0
    %1642 = vmatmul.mubr.f32.gmra.mxu0 %v1575
    %v1643 = vpop.f32.mrf.mxu0
    %v1644 = vadd.f32 0.0, %v1643
    %v1645 = vpop.f32.mrf.mxu0
    %1646 = vdwg.mxu0
    %v1648 = vrot.slane %v1644, 4
    %v1649 = vrot.slane %v1644, 5
    %v1652 = vadd.f32 %v1015, %v1648
    %v1653 = vadd.f32 %v1020, %v1649
    %v1654 = vxor.u32 %v1652, 2147483648
    %v1655 = vxor.u32 %v1653, 2147483648
    %v1656 = vmul.f32 %v1654, 1.442695
    %v1657 = vpow.pop %v1656
    %v1658 = vmul.f32 %v1655, 1.442695
    %v1659 = vpow.pop %v1658
    %v1660 = vadd.f32 %v1657, 1.0
    %v1661 = vadd.f32 %v1659, 1.0
    %v1662 = vrcp.pop %v1660
    %v1663 = vmul.f32 1.0, %v1662
    %v1664 = vrcp.pop %v1661
    %v1665 = vmul.f32 1.0, %v1664
    %v1666 = vtanh.pop %v1652
    %v1667 = vtanh.pop %v1653
    %v1670 = vrot.slane %v1554, 7
    %v1671 = vrot.slane %v1555, 7
    %v1674 = vmul.f32 %v1663, %v1670
    %v1675 = vmul.f32 %v1665, %v1671
    %1678 = vrot.lane.b32.xlu0 %v1666, 32
    %v1679 = vpop.permute.xlu0 %1678
    %1680 = vrot.lane.b32.xlu0 %v1667, 32
    %v1681 = vpop.permute.xlu0 %1680
    %v1684 = vmul.f32 %v1663, %v1679
    %v1685 = vmul.f32 %v1665, %v1681
    %1688 = vrot.lane.b32.xlu0 %v1684, 32
    %v1689 = vpop.permute.xlu0 %1688
    %1690 = vrot.lane.b32.xlu0 %v1685, 32
    %v1691 = vpop.permute.xlu0 %1690
    %v1694 = vadd.f32 %v1674, %v1689
    %v1695 = vadd.f32 %v1675, %v1691
    %v1696 = vtanh.pop %v1694
    %v1697 = vtanh.pop %v1695
    %1700 = vrot.lane.b32.xlu0 %v1696, 32
    %v1701 = vpop.permute.xlu0 %1700
    %1702 = vrot.lane.b32.xlu0 %v1697, 32
    %v1703 = vpop.permute.xlu0 %1702
    %v1706 = vmul.f32 %v1663, %v1701
    %v1707 = vmul.f32 %v1665, %v1703
    %v1710 = vrot.slane %v1706, 4
    %v1711 = vrot.slane %v1707, 3
    %v1712 = vsel %vm1153, %v1711, %v1710
    %1713 = vrot.lane.b32.xlu0 %v1712, 64
    %v1714 = vpop.permute.xlu0 %1713
    %v1715 = vsel %vm394, %v1714, 0
    %1717 = vmatprep.subr.mxu0 0.0
    %1718 = vmatpush1.msra.mxu0 0.0
    %1719 = vmatprep.subr.mxu0 0.0
    %1720 = vmatpush1.msra.mxu0 0.0
    %1721 = vmatprep.subr.mxu0 0.0
    %1722 = vmatpush1.msra.mxu0 0.0
    %1723 = vmatprep.subr.mxu0 0.0
    %1724 = vmatpush1.msra.mxu0 0.0
    %1725 = vmatprep.subr.mxu0 0.0
    %1726 = vmatpush1.msra.mxu0 0.0
    %1727 = vmatprep.subr.mxu0 0.0
    %1728 = vmatpush1.msra.mxu0 0.0
    %1729 = vmatprep.subr.mxu0 0.0
    %1730 = vmatpush1.msra.mxu0 0.0
    %1731 = vmatprep.subr.mxu0 0.0
    %1732 = vmatpush1.msra.mxu0 0.0
    %1733 = vmatprep.subr.mxu0 0.0
    %1734 = vmatpush1.msra.mxu0 0.0
    %1735 = vmatprep.subr.mxu0 0.0
    %1736 = vmatpush1.msra.mxu0 0.0
    %1737 = vmatprep.subr.mxu0 0.0
    %1738 = vmatpush1.msra.mxu0 0.0
    %1739 = vmatprep.subr.mxu0 0.0
    %1740 = vmatpush1.msra.mxu0 0.0
    %1741 = vmatprep.subr.mxu0 0.0
    %1742 = vmatpush1.msra.mxu0 %v934
    %1743 = vmatprep.subr.mxu0 0.0
    %1744 = vmatpush1.msra.mxu0 %v933
    %1745 = vmatprep.subr.mxu0 0.0
    %1746 = vmatpush1.msra.mxu0 %v932
    %1747 = vmatprep.subr.mxu0 0.0
    %1748 = vmatpush1.msra.mxu0 %v931
    %1749 = vmatprep.subr.mxu0 0.0
    %1750 = vmatpush2.msra.mxu0 0.0
    %1751 = vmatprep.subr.mxu0 0.0
    %1752 = vmatpush2.msra.mxu0 0.0
    %1753 = vmatprep.subr.mxu0 0.0
    %1754 = vmatpush2.msra.mxu0 0.0
    %1755 = vmatprep.subr.mxu0 0.0
    %1756 = vmatpush2.msra.mxu0 0.0
    %1757 = vmatprep.subr.mxu0 0.0
    %1758 = vmatpush2.msra.mxu0 0.0
    %1759 = vmatprep.subr.mxu0 0.0
    %1760 = vmatpush2.msra.mxu0 0.0
    %1761 = vmatprep.subr.mxu0 0.0
    %1762 = vmatpush2.msra.mxu0 0.0
    %1763 = vmatprep.subr.mxu0 0.0
    %1764 = vmatpush2.msra.mxu0 0.0
    %1765 = vmatprep.subr.mxu0 0.0
    %1766 = vmatpush2.msra.mxu0 0.0
    %1767 = vmatprep.subr.mxu0 0.0
    %1768 = vmatpush2.msra.mxu0 0.0
    %1769 = vmatprep.subr.mxu0 0.0
    %1770 = vmatpush2.msra.mxu0 0.0
    %1771 = vmatprep.subr.mxu0 0.0
    %1772 = vmatpush2.msra.mxu0 0.0
    %1773 = vmatprep.subr.mxu0 0.0
    %1774 = vmatpush2.msra.mxu0 0.0
    %1775 = vmatprep.subr.mxu0 0.0
    %1776 = vmatpush2.msra.mxu0 0.0
    %1777 = vmatprep.subr.mxu0 0.0
    %1778 = vmatpush2.msra.mxu0 0.0
    %1779 = vmatprep.subr.mxu0 0.0
    %1780 = vmatpush2.msra.mxu0 0.0
    %1781 = vmatprep.mubr.f32.mxu0 0.0
    %1782 = vmatmul.mubr.f32.gmra.mxu0 %v1715
    %v1783 = vpop.f32.mrf.mxu0
    %v1784 = vadd.f32 0.0, %v1783
    %v1785 = vpop.f32.mrf.mxu0
    %1786 = vdwg.mxu0
    %v1788 = vrot.slane %v1784, 3
    %v1789 = vrot.slane %v1784, 4
    %v1792 = vadd.f32 %v1015, %v1788
    %v1793 = vadd.f32 %v1020, %v1789
    %v1794 = vxor.u32 %v1792, 2147483648
    %v1795 = vxor.u32 %v1793, 2147483648
    %v1796 = vmul.f32 %v1794, 1.442695
    %v1797 = vpow.pop %v1796
    %v1798 = vmul.f32 %v1795, 1.442695
    %v1799 = vpow.pop %v1798
    %v1800 = vadd.f32 %v1797, 1.0
    %v1801 = vadd.f32 %v1799, 1.0
    %v1802 = vrcp.pop %v1800
    %v1803 = vmul.f32 1.0, %v1802
    %v1804 = vrcp.pop %v1801
    %v1805 = vmul.f32 1.0, %v1804
    %v1806 = vtanh.pop %v1792
    %v1807 = vtanh.pop %v1793
    %v1810 = vrot.slane %v1694, 7
    %v1811 = vrot.slane %v1695, 7
    %v1814 = vmul.f32 %v1803, %v1810
    %v1815 = vmul.f32 %v1805, %v1811
    %1818 = vrot.lane.b32.xlu0 %v1806, 32
    %v1819 = vpop.permute.xlu0 %1818
    %1820 = vrot.lane.b32.xlu0 %v1807, 32
    %v1821 = vpop.permute.xlu0 %1820
    %v1824 = vmul.f32 %v1803, %v1819
    %v1825 = vmul.f32 %v1805, %v1821
    %1828 = vrot.lane.b32.xlu0 %v1824, 32
    %v1829 = vpop.permute.xlu0 %1828
    %1830 = vrot.lane.b32.xlu0 %v1825, 32
    %v1831 = vpop.permute.xlu0 %1830
    %v1834 = vadd.f32 %v1814, %v1829
    %v1835 = vadd.f32 %v1815, %v1831
    %v1836 = vtanh.pop %v1834
    %v1837 = vtanh.pop %v1835
    %1840 = vrot.lane.b32.xlu0 %v1836, 32
    %v1841 = vpop.permute.xlu0 %1840
    %1842 = vrot.lane.b32.xlu0 %v1837, 32
    %v1843 = vpop.permute.xlu0 %1842
    %v1846 = vmul.f32 %v1803, %v1841
    %v1847 = vmul.f32 %v1805, %v1843
    %v1850 = vrot.slane %v1846, 5
    %v1851 = vrot.slane %v1847, 4
    %v1852 = vsel %vm1153, %v1851, %v1850
    %1853 = vrot.lane.b32.xlu0 %v1852, 64
    %v1854 = vpop.permute.xlu0 %1853
    %v1855 = vsel %vm394, %v1854, 0
    %1857 = vmatprep.subr.mxu0 0.0
    %1858 = vmatpush1.msra.mxu0 0.0
    %1859 = vmatprep.subr.mxu0 0.0
    %1860 = vmatpush1.msra.mxu0 0.0
    %1861 = vmatprep.subr.mxu0 0.0
    %1862 = vmatpush1.msra.mxu0 0.0
    %1863 = vmatprep.subr.mxu0 0.0
    %1864 = vmatpush1.msra.mxu0 0.0
    %1865 = vmatprep.subr.mxu0 0.0
    %1866 = vmatpush1.msra.mxu0 0.0
    %1867 = vmatprep.subr.mxu0 0.0
    %1868 = vmatpush1.msra.mxu0 0.0
    %1869 = vmatprep.subr.mxu0 0.0
    %1870 = vmatpush1.msra.mxu0 0.0
    %1871 = vmatprep.subr.mxu0 0.0
    %1872 = vmatpush1.msra.mxu0 0.0
    %1873 = vmatprep.subr.mxu0 0.0
    %1874 = vmatpush1.msra.mxu0 0.0
    %1875 = vmatprep.subr.mxu0 0.0
    %1876 = vmatpush1.msra.mxu0 0.0
    %1877 = vmatprep.subr.mxu0 0.0
    %1878 = vmatpush1.msra.mxu0 0.0
    %1879 = vmatprep.subr.mxu0 0.0
    %1880 = vmatpush1.msra.mxu0 0.0
    %1881 = vmatprep.subr.mxu0 0.0
    %1882 = vmatpush1.msra.mxu0 %v934
    %1883 = vmatprep.subr.mxu0 0.0
    %1884 = vmatpush1.msra.mxu0 %v933
    %1885 = vmatprep.subr.mxu0 0.0
    %1886 = vmatpush1.msra.mxu0 %v932
    %1887 = vmatprep.subr.mxu0 0.0
    %1888 = vmatpush1.msra.mxu0 %v931
    %1889 = vmatprep.subr.mxu0 0.0
    %1890 = vmatpush2.msra.mxu0 0.0
    %1891 = vmatprep.subr.mxu0 0.0
    %1892 = vmatpush2.msra.mxu0 0.0
    %1893 = vmatprep.subr.mxu0 0.0
    %1894 = vmatpush2.msra.mxu0 0.0
    %1895 = vmatprep.subr.mxu0 0.0
    %1896 = vmatpush2.msra.mxu0 0.0
    %1897 = vmatprep.subr.mxu0 0.0
    %1898 = vmatpush2.msra.mxu0 0.0
    %1899 = vmatprep.subr.mxu0 0.0
    %1900 = vmatpush2.msra.mxu0 0.0
    %1901 = vmatprep.subr.mxu0 0.0
    %1902 = vmatpush2.msra.mxu0 0.0
    %1903 = vmatprep.subr.mxu0 0.0
    %1904 = vmatpush2.msra.mxu0 0.0
    %1905 = vmatprep.subr.mxu0 0.0
    %1906 = vmatpush2.msra.mxu0 0.0
    %1907 = vmatprep.subr.mxu0 0.0
    %1908 = vmatpush2.msra.mxu0 0.0
    %1909 = vmatprep.subr.mxu0 0.0
    %1910 = vmatpush2.msra.mxu0 0.0
    %1911 = vmatprep.subr.mxu0 0.0
    %1912 = vmatpush2.msra.mxu0 0.0
    %1913 = vmatprep.subr.mxu0 0.0
    %1914 = vmatpush2.msra.mxu0 0.0
    %1915 = vmatprep.subr.mxu0 0.0
    %1916 = vmatpush2.msra.mxu0 0.0
    %1917 = vmatprep.subr.mxu0 0.0
    %1918 = vmatpush2.msra.mxu0 0.0
    %1919 = vmatprep.subr.mxu0 0.0
    %1920 = vmatpush2.msra.mxu0 0.0
    %1921 = vmatprep.mubr.f32.mxu0 0.0
    %1922 = vmatmul.mubr.f32.gmra.mxu0 %v1855
    %v1923 = vpop.f32.mrf.mxu0
    %v1924 = vadd.f32 0.0, %v1923
    %v1925 = vpop.f32.mrf.mxu0
    %1926 = vdwg.mxu0
    %v1928 = vrot.slane %v1924, 2
    %v1929 = vrot.slane %v1924, 3
    %v1932 = vadd.f32 %v1015, %v1928
    %v1933 = vadd.f32 %v1020, %v1929
    %v1934 = vxor.u32 %v1932, 2147483648
    %v1935 = vxor.u32 %v1933, 2147483648
    %v1936 = vmul.f32 %v1934, 1.442695
    %v1937 = vpow.pop %v1936
    %v1938 = vmul.f32 %v1935, 1.442695
    %v1939 = vpow.pop %v1938
    %v1940 = vadd.f32 %v1937, 1.0
    %v1941 = vadd.f32 %v1939, 1.0
    %v1942 = vrcp.pop %v1940
    %v1943 = vmul.f32 1.0, %v1942
    %v1944 = vrcp.pop %v1941
    %v1945 = vmul.f32 1.0, %v1944
    %v1946 = vtanh.pop %v1932
    %v1947 = vtanh.pop %v1933
    %v1950 = vrot.slane %v1834, 7
    %v1951 = vrot.slane %v1835, 7
    %v1954 = vmul.f32 %v1943, %v1950
    %v1955 = vmul.f32 %v1945, %v1951
    %1958 = vrot.lane.b32.xlu0 %v1946, 32
    %v1959 = vpop.permute.xlu0 %1958
    %1960 = vrot.lane.b32.xlu0 %v1947, 32
    %v1961 = vpop.permute.xlu0 %1960
    %v1964 = vmul.f32 %v1943, %v1959
    %v1965 = vmul.f32 %v1945, %v1961
    %1968 = vrot.lane.b32.xlu0 %v1964, 32
    %v1969 = vpop.permute.xlu0 %1968
    %1970 = vrot.lane.b32.xlu0 %v1965, 32
    %v1971 = vpop.permute.xlu0 %1970
    %v1974 = vadd.f32 %v1954, %v1969
    %v1975 = vadd.f32 %v1955, %v1971
    %v1976 = vtanh.pop %v1974
    %v1977 = vtanh.pop %v1975
    %1980 = vrot.lane.b32.xlu0 %v1976, 32
    %v1981 = vpop.permute.xlu0 %1980
    %1982 = vrot.lane.b32.xlu0 %v1977, 32
    %v1983 = vpop.permute.xlu0 %1982
    %v1986 = vmul.f32 %v1943, %v1981
    %v1987 = vmul.f32 %v1945, %v1983
    %v1990 = vrot.slane %v1986, 6
    %v1991 = vrot.slane %v1987, 5
    %v1992 = vsel %vm1153, %v1991, %v1990
    %1993 = vrot.lane.b32.xlu0 %v1992, 64
    %v1994 = vpop.permute.xlu0 %1993
    %v1995 = vsel %vm394, %v1994, 0
    %1997 = vmatprep.subr.mxu0 0.0
    %1998 = vmatpush1.msra.mxu0 0.0
    %1999 = vmatprep.subr.mxu0 0.0
    %2000 = vmatpush1.msra.mxu0 0.0
    %2001 = vmatprep.subr.mxu0 0.0
    %2002 = vmatpush1.msra.mxu0 0.0
    %2003 = vmatprep.subr.mxu0 0.0
    %2004 = vmatpush1.msra.mxu0 0.0
    %2005 = vmatprep.subr.mxu0 0.0
    %2006 = vmatpush1.msra.mxu0 0.0
    %2007 = vmatprep.subr.mxu0 0.0
    %2008 = vmatpush1.msra.mxu0 0.0
    %2009 = vmatprep.subr.mxu0 0.0
    %2010 = vmatpush1.msra.mxu0 0.0
    %2011 = vmatprep.subr.mxu0 0.0
    %2012 = vmatpush1.msra.mxu0 0.0
    %2013 = vmatprep.subr.mxu0 0.0
    %2014 = vmatpush1.msra.mxu0 0.0
    %2015 = vmatprep.subr.mxu0 0.0
    %2016 = vmatpush1.msra.mxu0 0.0
    %2017 = vmatprep.subr.mxu0 0.0
    %2018 = vmatpush1.msra.mxu0 0.0
    %2019 = vmatprep.subr.mxu0 0.0
    %2020 = vmatpush1.msra.mxu0 0.0
    %2021 = vmatprep.subr.mxu0 0.0
    %2022 = vmatpush1.msra.mxu0 %v934
    %2023 = vmatprep.subr.mxu0 0.0
    %2024 = vmatpush1.msra.mxu0 %v933
    %2025 = vmatprep.subr.mxu0 0.0
    %2026 = vmatpush1.msra.mxu0 %v932
    %2027 = vmatprep.subr.mxu0 0.0
    %2028 = vmatpush1.msra.mxu0 %v931
    %2029 = vmatprep.subr.mxu0 0.0
    %2030 = vmatpush2.msra.mxu0 0.0
    %2031 = vmatprep.subr.mxu0 0.0
    %2032 = vmatpush2.msra.mxu0 0.0
    %2033 = vmatprep.subr.mxu0 0.0
    %2034 = vmatpush2.msra.mxu0 0.0
    %2035 = vmatprep.subr.mxu0 0.0
    %2036 = vmatpush2.msra.mxu0 0.0
    %2037 = vmatprep.subr.mxu0 0.0
    %2038 = vmatpush2.msra.mxu0 0.0
    %2039 = vmatprep.subr.mxu0 0.0
    %2040 = vmatpush2.msra.mxu0 0.0
    %2041 = vmatprep.subr.mxu0 0.0
    %2042 = vmatpush2.msra.mxu0 0.0
    %2043 = vmatprep.subr.mxu0 0.0
    %2044 = vmatpush2.msra.mxu0 0.0
    %2045 = vmatprep.subr.mxu0 0.0
    %2046 = vmatpush2.msra.mxu0 0.0
    %2047 = vmatprep.subr.mxu0 0.0
    %2048 = vmatpush2.msra.mxu0 0.0
    %2049 = vmatprep.subr.mxu0 0.0
    %2050 = vmatpush2.msra.mxu0 0.0
    %2051 = vmatprep.subr.mxu0 0.0
    %2052 = vmatpush2.msra.mxu0 0.0
    %2053 = vmatprep.subr.mxu0 0.0
    %2054 = vmatpush2.msra.mxu0 0.0
    %2055 = vmatprep.subr.mxu0 0.0
    %2056 = vmatpush2.msra.mxu0 0.0
    %2057 = vmatprep.subr.mxu0 0.0
    %2058 = vmatpush2.msra.mxu0 0.0
    %2059 = vmatprep.subr.mxu0 0.0
    %2060 = vmatpush2.msra.mxu0 0.0
    %2061 = vmatprep.mubr.f32.mxu0 0.0
    %2062 = vmatmul.mubr.f32.gmra.mxu0 %v1995
    %v2063 = vpop.f32.mrf.mxu0
    %v2064 = vadd.f32 0.0, %v2063
    %v2065 = vpop.f32.mrf.mxu0
    %2066 = vdwg.mxu0
    %v2068 = vrot.slane %v2064, 1
    %v2069 = vrot.slane %v2064, 2
    %v2072 = vadd.f32 %v1015, %v2068
    %v2073 = vadd.f32 %v1020, %v2069
    %v2074 = vxor.u32 %v2072, 2147483648
    %v2075 = vxor.u32 %v2073, 2147483648
    %v2076 = vmul.f32 %v2074, 1.442695
    %v2077 = vpow.pop %v2076
    %v2078 = vmul.f32 %v2075, 1.442695
    %v2079 = vpow.pop %v2078
    %v2080 = vadd.f32 %v2077, 1.0
    %v2081 = vadd.f32 %v2079, 1.0
    %v2082 = vrcp.pop %v2080
    %v2083 = vmul.f32 1.0, %v2082
    %v2084 = vrcp.pop %v2081
    %v2085 = vmul.f32 1.0, %v2084
    %v2086 = vtanh.pop %v2072
    %v2087 = vtanh.pop %v2073
    %v2090 = vrot.slane %v1974, 7
    %v2091 = vrot.slane %v1975, 7
    %v2094 = vmul.f32 %v2083, %v2090
    %v2095 = vmul.f32 %v2085, %v2091
    %2098 = vrot.lane.b32.xlu0 %v2086, 32
    %v2099 = vpop.permute.xlu0 %2098
    %2100 = vrot.lane.b32.xlu0 %v2087, 32
    %v2101 = vpop.permute.xlu0 %2100
    %v2104 = vmul.f32 %v2083, %v2099
    %v2105 = vmul.f32 %v2085, %v2101
    %2108 = vrot.lane.b32.xlu0 %v2104, 32
    %v2109 = vpop.permute.xlu0 %2108
    %2110 = vrot.lane.b32.xlu0 %v2105, 32
    %v2111 = vpop.permute.xlu0 %2110
    %v2114 = vadd.f32 %v2094, %v2109
    %v2115 = vadd.f32 %v2095, %v2111
    %v2116 = vtanh.pop %v2114
    %v2117 = vtanh.pop %v2115
    %2120 = vrot.lane.b32.xlu0 %v2116, 32
    %v2121 = vpop.permute.xlu0 %2120
    %2122 = vrot.lane.b32.xlu0 %v2117, 32
    %v2123 = vpop.permute.xlu0 %2122
    %v2126 = vmul.f32 %v2083, %v2121
    %v2127 = vmul.f32 %v2085, %v2123
    %v2130 = vrot.slane %v2127, 7
    %2131 = vrot.lane.b32.xlu0 %v2126, 64
    %v2132 = vpop.permute.xlu0 %2131
    %2133 = vrot.lane.b32.xlu0 %v2130, 64
    %v2134 = vpop.permute.xlu0 %2133
    %vm2137 = vcmask 261127
    %2138 = vst.msk [vmem:[#allocation3 - $0x7] sm:$0x80] %vm2137, %v2132
    %vm2139 = vcmask 253952
    %2140 = vst.msk [vmem:[#allocation3 + $0x1] sm:$0x1] %vm2139, %v2134
    // Predicated region
    $region66: #{tpu_custom_call.1} parent=1 // pred_check
      _
    $region67: #{tpu_custom_call.1} parent=1 // pred_check_branch
      %2142 = sbr.rel (0) target = $region69
    $region68: #{tpu_custom_call.1} parent=1 // pred_region
      %s2144 = ssub.s32 32, 32
      %2145 = vsyncadd [#allocation4], %s2144
      %s2147 = sshll.u32 [#allocation3], 4
      %s2148 = int_to_ptr.vmem [resolvable:$true] %s2147
      %2150 = dma.vmem_to_hbm [thread:$0]  %s2148, 32, %s16, [#allocation4]
    $region69: #{tpu_custom_call.1} parent=1 // pred_fallthru
      _
    // Predicated region
    $region70: #{tpu_custom_call.1} parent=1 // pred_check
      _
    $region71: #{tpu_custom_call.1} parent=1 // pred_check_branch
      %2152 = sbr.rel (0) target = $region73
    $region72: #{tpu_custom_call.1} parent=1 // pred_region
      %2153 = dma.done [#allocation4], 32
    $region73: #{tpu_custom_call.1} parent=1 // pred_fallthru
      _
    %2154 = vsyncpa [#allocation4], 1

</llo_original>
